<compile_context>
chip_gen: v6e
topology: v6e:2x2x1
jax: 0.10.0
libtpu: 0.0.40
codegen_flags: <defaults>
</compile_context>

<pallas_src>
import functools
import math

import jax
import jax.numpy as jnp
from jax.experimental import pallas as pl
from jax.experimental.pallas import tpu as pltpu

LANE = 128  # every hidden/latent dim is zero-padded to a multiple of 128 lanes


def _round_up(x, m):
    return ((x + m - 1) // m) * m


# ----------------------------------------------------------------------------
# In-kernel helpers (operate on values already resident in vregs/VMEM).
# ----------------------------------------------------------------------------
def _apply_mlp(xs, refs, num_layers):
    """xs: list of [M, K_i] f32 values.  refs: flat (w0_0..w0_n, b0, (w, b)*).
    Layer 0 computes sum_i x_i @ W0_i  (torch.cat folded into a row-split weight),
    so the concatenated activation is never materialized.  Hidden-layer weights are
    bf16 (MXU), accumulation / bias / ReLU in f32.  Returns [M, out_padded] f32."""
    idx = 0
    h = None
    for x in xs:                                       # layer 0 (tiny K) in f32
        w = refs[idx][...]; idx += 1
        part = jnp.dot(x, w, preferred_element_type=jnp.float32)
        h = part if h is None else h + part
    h = h + refs[idx][...]; idx += 1                   # layer-0 bias (f32)
    if num_layers > 1:
        h = jnp.maximum(h, 0.0)
    for layer in range(1, num_layers):
        w = refs[idx][...]; b = refs[idx + 1][...]; idx += 2
        h = jnp.dot(h.astype(w.dtype), w, preferred_element_type=jnp.float32) + b
        if layer < num_layers - 1:
            h = jnp.maximum(h, 0.0)
    return h


def _dot_attention(q, k, v):
    """Single-head dot attention for one batch element; the 1/sqrt(d_k) scale has
    already been applied to q (or folded into the query MLP).  Zero-padded latent
    columns contribute nothing to the contraction, so the result matches the
    unpadded math exactly.  bf16 MXU inputs, f32 scores / softmax statistics.
    NOTE: the score tile's lane dim equals Nk; it is lane-dense whenever the
    context length is a multiple of 128 (trivially small here)."""
    s = jnp.einsum("qd,kd->qk", q.astype(jnp.bfloat16), k.astype(jnp.bfloat16),
                   preferred_element_type=jnp.float32)
    m = jnp.max(s, axis=-1, keepdims=True)
    e = jnp.exp(s - m)
    w = e * (1.0 / jnp.sum(e, axis=-1, keepdims=True))          # exact softmax
    return jnp.einsum("qk,kd->qd", w.astype(jnp.bfloat16), v.astype(jnp.bfloat16),
                      preferred_element_type=jnp.float32)


# ----------------------------------------------------------------------------
# The fused forward kernel: one grid step == one batch element, everything in VMEM.
# ----------------------------------------------------------------------------
def _det_encoder_kernel(*refs, num_layers, latent):
    cx_ref, cy_ref, tx_ref = refs[:3]
    o_ref = refs[-1]
    w = refs[3:-1]

    n_enc = 2 + 1 + 2 * (num_layers - 1)   # refs used by the 2-input encoder MLP
    n_one = 1 + 1 + 2 * (num_layers - 1)   # refs used by a single-input MLP

    cx = cx_ref[...]                        # [Nc, Dx] f32
    cy = cy_ref[...]                        # [Nc, Dy] f32
    tx = tx_ref[...]                        # [Nt, Dx] f32

    # hidden_r_i = deter_encoder_mlp(cat([context_x, context_y], dim=-1))
    hidden = _apply_mlp([cx, cy], w[:n_enc], num_layers)                   # [Nc, Dp]
    # self-attention (dot, rep='identity'): q = k = v = hidden_r_i.
    # Pre-scale q instead of scaling the (Nq x Nk) score tensor.
    hidden = _dot_attention(hidden * (1.0 / math.sqrt(latent)), hidden, hidden)
    # cross-attention (dot, rep='mlp'): k = mlp(context_x), q = mlp(target_x)
    # (1/sqrt(d_k) folded into mlp_q's last layer at init), v = hidden_r_i.
    k = _apply_mlp([cx], w[n_enc:n_enc + n_one], num_layers)               # [Nc, Dp]
    q = _apply_mlp([tx], w[n_enc + n_one:], num_layers)                    # [Nt, Dp]
    o_ref[...] = _dot_attention(q, k, hidden).astype(o_ref.dtype)          # [Nt, Dp]


# ----------------------------------------------------------------------------
# Parameters: PyTorch nn.Linear-style init at logical sizes, zero-padded to 128
# lanes (padding columns/rows are exactly zero everywhere -> identical math).
# ----------------------------------------------------------------------------
def _init_linear(key, in_dim, out_dim):
    kw, kb = jax.random.split(key)
    bound = 1.0 / math.sqrt(in_dim)
    w = jax.random.uniform(kw, (in_dim, out_dim), jnp.float32, -bound, bound)
    b = jax.random.uniform(kb, (1, out_dim), jnp.float32, -bound, bound)
    return w, b


def _pad_to(a, rows=None, cols=None):
    r = 0 if rows is None else rows - a.shape[0]
    c = 0 if cols is None else cols - a.shape[1]
    return jnp.pad(a, ((0, r), (0, c)))


def init_mlp_params(key, in_dims, sizes, out_scale=1.0):
    """Layer-0 weight is row-split per input (concat folding) and kept f32 (tiny K);
    hidden-layer weights are stored bf16 for the MXU; biases stay f32.  `out_scale`
    (e.g. 1/sqrt(d_k)) is folded into the final layer's weight and bias."""
    layers = []
    prev = sum(in_dims)
    for s in sizes:
        key, sub = jax.random.split(key)
        layers.append(_init_linear(sub, prev, s))
        prev = s
    num_layers = len(sizes)

    w0, b0 = layers[0]
    if num_layers == 1:
        w0, b0 = w0 * out_scale, b0 * out_scale
    h0p = _round_up(sizes[0], LANE)
    w0p = _pad_to(w0, cols=h0p)
    splits, off = [], 0
    for d in in_dims:                                  # row-split of layer-0 weight
        splits.append(w0p[off:off + d])
        off += d
    params = {"w0": splits, "b0": _pad_to(b0, cols=h0p), "rest": []}

    prev_p = h0p
    for i, ((w, b), s) in enumerate(zip(layers[1:], sizes[1:]), start=1):
        if i == num_layers - 1:
            w, b = w * out_scale, b * out_scale
        sp = _round_up(s, LANE)
        params["rest"].append((_pad_to(w, rows=prev_p, cols=sp).astype(jnp.bfloat16),
                               _pad_to(b, cols=sp)))
        prev_p = sp
    return params


def init_deterministic_encoder(key, input_x_dim, input_y_dim, hidden_dim_list,
                               latent_dim=32):
    k1, k2, k3 = jax.random.split(key, 3)
    scale = 1.0 / math.sqrt(latent_dim)   # cross-attention scale -> folded into q-MLP
    return {
        "encoder_mlp": init_mlp_params(k1, [input_x_dim, input_y_dim], hidden_dim_list),
        "cross_k_mlp": init_mlp_params(k2, [input_x_dim], hidden_dim_list),
        "cross_q_mlp": init_mlp_params(k3, [input_x_dim], hidden_dim_list,
                                       out_scale=scale),
        "latent_dim": latent_dim,
        "num_layers": len(hidden_dim_list),
    }


def _flatten_mlp(p):
    ops = list(p["w0"]) + [p["b0"]]
    for (w, b) in p["rest"]:
        ops += [w, b]
    return ops


# ----------------------------------------------------------------------------
# Forward pass (matches DeterministicEncoder.forward) — single pallas_call.
# ----------------------------------------------------------------------------
def deterministic_encoder_forward(params, context_x, context_y, target_x):
    B, Nc, Dx = context_x.shape
    Dy = context_y.shape[-1]
    Nt = target_x.shape[1]
    latent = params["latent_dim"]
    num_layers = params["num_layers"]
    Dp = _round_up(latent, LANE)

    weights = (_flatten_mlp(params["encoder_mlp"])
               + _flatten_mlp(params["cross_k_mlp"])
               + _flatten_mlp(params["cross_q_mlp"]))

    const_spec = lambda a: pl.BlockSpec(a.shape, lambda b: (0, 0))
    in_specs = [
        pl.BlockSpec((None, Nc, Dx), lambda b: (b, 0, 0)),   # context_x (per batch)
        pl.BlockSpec((None, Nc, Dy), lambda b: (b, 0, 0)),   # context_y
        pl.BlockSpec((None, Nt, Dx), lambda b: (b, 0, 0)),   # target_x
    ] + [const_spec(a) for a in weights]                     # constant weight blocks

    out = pl.pallas_call(
        functools.partial(_det_encoder_kernel, num_layers=num_layers, latent=latent),
        out_shape=jax.ShapeDtypeStruct((B, Nt, Dp), jnp.float32),
        grid=(B,),                                           # no host-side padding
        in_specs=in_specs,
        out_specs=pl.BlockSpec((None, Nt, Dp), lambda b: (b, 0, 0)),  # lane-dense vst
        compiler_params=pltpu.CompilerParams(
            dimension_semantics=("parallel",),               # v7x: both TCs for B>=2
            vmem_limit_bytes=32 * 1024 * 1024,               # v5e default is only 16 MiB
        ),
    )(context_x, context_y, target_x, *weights)
    return out[..., :latent]      # drop the zero padding columns -> [B, Nt, latent]


# ----------------------------------------------------------------------------
# Pure-JAX f32 reference (same padded weights) for a correctness check.
# ----------------------------------------------------------------------------
def _mlp_ref(xs, p, num_layers):
    h = sum(x @ w.astype(jnp.float32) for x, w in zip(xs, p["w0"])) + p["b0"]
    if num_layers > 1:
        h = jnp.maximum(h, 0.0)
    for i, (w, b) in enumerate(p["rest"], start=1):
        h = h @ w.astype(jnp.float32) + b
        if i < num_layers - 1:
            h = jnp.maximum(h, 0.0)
    return h


def _attn_ref(q, k, v):
    s = jnp.einsum("bqd,bkd->bqk", q, k)
    return jnp.einsum("bqk,bkd->bqd", jax.nn.softmax(s, axis=-1), v)


def deterministic_encoder_reference(params, context_x, context_y, target_x):
    num_layers = params["num_layers"]
    latent = params["latent_dim"]
    scale = 1.0 / math.sqrt(latent)
    hidden = _mlp_ref([context_x, context_y], params["encoder_mlp"], num_layers)
    hidden = _attn_ref(hidden * scale, hidden, hidden)
    k = _mlp_ref([context_x], params["cross_k_mlp"], num_layers)
    q = _mlp_ref([target_x], params["cross_q_mlp"], num_layers)   # scale already folded
    return _attn_ref(q, k, hidden)[..., :latent]


# ----------------------------------------------------------------------------
# Demo
# ----------------------------------------------------------------------------
if __name__ == "__main__":
    B, N_CTX, N_TGT = 2, 8, 8
    INPUT_X_DIM, INPUT_Y_DIM = 3, 2
    HIDDEN_DIM_LIST = [32, 32]   # latent_dim = hidden_dim_list[-1] = 32

    key = jax.random.PRNGKey(0)
    k_params, k_cx, k_cy, k_tx = jax.random.split(key, 4)

    params = init_deterministic_encoder(k_params, INPUT_X_DIM, INPUT_Y_DIM,
                                        HIDDEN_DIM_LIST)

    context_x = jax.random.normal(k_cx, (B, N_CTX, INPUT_X_DIM), jnp.float32)
    context_y = jax.random.normal(k_cy, (B, N_CTX, INPUT_Y_DIM), jnp.float32)
    target_x = jax.random.normal(k_tx, (B, N_TGT, INPUT_X_DIM), jnp.float32)

    out = deterministic_encoder_forward(params, context_x, context_y, target_x)
    out = jax.block_until_ready(out)

    assert out.shape == (B, N_TGT, HIDDEN_DIM_LIST[-1]), out.shape
    assert bool(jnp.all(jnp.isfinite(out)))

    ref = deterministic_encoder_reference(params, context_x, context_y, target_x)
    max_err = float(jnp.max(jnp.abs(out - ref)))
    assert max_err < 0.05, f"kernel vs reference mismatch: max abs err = {max_err}"

    print("KERNEL_OK")
</pallas_src>

<mosaic_0001>
module attributes {stable_mosaic.version = 11 : i64} {
  func.func @_det_encoder_kernel(%arg0: i32, %arg1: memref<1x8x3xf32, #tpu.memory_space<vmem>>, %arg2: memref<1x8x2xf32, #tpu.memory_space<vmem>>, %arg3: memref<1x8x3xf32, #tpu.memory_space<vmem>>, %arg4: memref<3x128xf32, #tpu.memory_space<vmem>>, %arg5: memref<2x128xf32, #tpu.memory_space<vmem>>, %arg6: memref<1x128xf32, #tpu.memory_space<vmem>>, %arg7: memref<128x128xbf16, #tpu.memory_space<vmem>>, %arg8: memref<1x128xf32, #tpu.memory_space<vmem>>, %arg9: memref<3x128xf32, #tpu.memory_space<vmem>>, %arg10: memref<1x128xf32, #tpu.memory_space<vmem>>, %arg11: memref<128x128xbf16, #tpu.memory_space<vmem>>, %arg12: memref<1x128xf32, #tpu.memory_space<vmem>>, %arg13: memref<3x128xf32, #tpu.memory_space<vmem>>, %arg14: memref<1x128xf32, #tpu.memory_space<vmem>>, %arg15: memref<128x128xbf16, #tpu.memory_space<vmem>>, %arg16: memref<1x128xf32, #tpu.memory_space<vmem>>, %arg17: memref<1x8x128xf32, #tpu.memory_space<vmem>>) attributes {dimension_semantics = [#tpu.dimension_semantics<parallel>], iteration_bounds = array<i64: 2>, scalar_prefetch = 0 : i64, scratch_operands = 0 : i64, tpu.core_type = #tpu.core_type<tc>, window_params = [{transform_indices = @transform_0, window_bounds = array<i64: 1, 8, 3>}, {transform_indices = @transform_1, window_bounds = array<i64: 1, 8, 2>}, {transform_indices = @transform_2, window_bounds = array<i64: 1, 8, 3>}, {pipeline_mode = #tpu.pipeline_mode<synchronous>, transform_indices = @transform_3, window_bounds = array<i64: 3, 128>}, {pipeline_mode = #tpu.pipeline_mode<synchronous>, transform_indices = @transform_4, window_bounds = array<i64: 2, 128>}, {pipeline_mode = #tpu.pipeline_mode<synchronous>, transform_indices = @transform_5, window_bounds = array<i64: 1, 128>}, {pipeline_mode = #tpu.pipeline_mode<synchronous>, transform_indices = @transform_6, window_bounds = array<i64: 128, 128>}, {pipeline_mode = #tpu.pipeline_mode<synchronous>, transform_indices = @transform_7, window_bounds = array<i64: 1, 128>}, {pipeline_mode = #tpu.pipeline_mode<synchronous>, transform_indices = @transform_8, window_bounds = array<i64: 3, 128>}, {pipeline_mode = #tpu.pipeline_mode<synchronous>, transform_indices = @transform_9, window_bounds = array<i64: 1, 128>}, {pipeline_mode = #tpu.pipeline_mode<synchronous>, transform_indices = @transform_10, window_bounds = array<i64: 128, 128>}, {pipeline_mode = #tpu.pipeline_mode<synchronous>, transform_indices = @transform_11, window_bounds = array<i64: 1, 128>}, {pipeline_mode = #tpu.pipeline_mode<synchronous>, transform_indices = @transform_12, window_bounds = array<i64: 3, 128>}, {pipeline_mode = #tpu.pipeline_mode<synchronous>, transform_indices = @transform_13, window_bounds = array<i64: 1, 128>}, {pipeline_mode = #tpu.pipeline_mode<synchronous>, transform_indices = @transform_14, window_bounds = array<i64: 128, 128>}, {pipeline_mode = #tpu.pipeline_mode<synchronous>, transform_indices = @transform_15, window_bounds = array<i64: 1, 128>}, {transform_indices = @transform_16, window_bounds = array<i64: 1, 8, 128>}]} {
    %c0 = arith.constant 0 : index
    %c0_0 = arith.constant 0 : index
    %c0_1 = arith.constant 0 : index
    %0 = vector.load %arg1[%c0, %c0_0, %c0_1] : memref<1x8x3xf32, #tpu.memory_space<vmem>>, vector<1x8x3xf32>
    %1 = vector.shape_cast %0 : vector<1x8x3xf32> to vector<8x3xf32>
    %c0_2 = arith.constant 0 : index
    %c0_3 = arith.constant 0 : index
    %c0_4 = arith.constant 0 : index
    %2 = vector.load %arg2[%c0_2, %c0_3, %c0_4] : memref<1x8x2xf32, #tpu.memory_space<vmem>>, vector<1x8x2xf32>
    %3 = vector.shape_cast %2 : vector<1x8x2xf32> to vector<8x2xf32>
    %c0_5 = arith.constant 0 : index
    %c0_6 = arith.constant 0 : index
    %c0_7 = arith.constant 0 : index
    %4 = vector.load %arg3[%c0_5, %c0_6, %c0_7] : memref<1x8x3xf32, #tpu.memory_space<vmem>>, vector<1x8x3xf32>
    %5 = vector.shape_cast %4 : vector<1x8x3xf32> to vector<8x3xf32>
    %c0_8 = arith.constant 0 : index
    %c0_9 = arith.constant 0 : index
    %6 = vector.load %arg4[%c0_8, %c0_9] : memref<3x128xf32, #tpu.memory_space<vmem>>, vector<3x128xf32>
    %cst = arith.constant dense<0.000000e+00> : vector<8x128xf32>
    %7 = tpu.matmul %1, %6, %cst {dimension_numbers = #tpu.dot_dimension_numbers<[1], [0], [0], [1], [0, 0, 1, 1], [], []>} : vector<8x3xf32>, vector<3x128xf32>, vector<8x128xf32> -> vector<8x128xf32>
    %c0_10 = arith.constant 0 : index
    %c0_11 = arith.constant 0 : index
    %8 = vector.load %arg5[%c0_10, %c0_11] : memref<2x128xf32, #tpu.memory_space<vmem>>, vector<2x128xf32>
    %cst_12 = arith.constant dense<0.000000e+00> : vector<8x128xf32>
    %9 = tpu.matmul %3, %8, %cst_12 {dimension_numbers = #tpu.dot_dimension_numbers<[1], [0], [0], [1], [0, 0, 1, 1], [], []>} : vector<8x2xf32>, vector<2x128xf32>, vector<8x128xf32> -> vector<8x128xf32>
    %10 = arith.addf %7, %9 : vector<8x128xf32>
    %c0_13 = arith.constant 0 : index
    %c0_14 = arith.constant 0 : index
    %11 = vector.load %arg6[%c0_13, %c0_14] : memref<1x128xf32, #tpu.memory_space<vmem>>, vector<1x128xf32>
    %12 = vector.broadcast %11 : vector<1x128xf32> to vector<8x128xf32>
    %13 = arith.addf %10, %12 : vector<8x128xf32>
    %cst_15 = arith.constant 0.000000e+00 : f32
    %14 = vector.broadcast %cst_15 : f32 to vector<8x128xf32>
    %15 = arith.maximumf %13, %14 : vector<8x128xf32>
    %c0_16 = arith.constant 0 : index
    %c0_17 = arith.constant 0 : index
    %16 = vector.load %arg7[%c0_16, %c0_17] : memref<128x128xbf16, #tpu.memory_space<vmem>>, vector<128x128xbf16>
    %c0_18 = arith.constant 0 : index
    %c0_19 = arith.constant 0 : index
    %17 = vector.load %arg8[%c0_18, %c0_19] : memref<1x128xf32, #tpu.memory_space<vmem>>, vector<1x128xf32>
    %18 = arith.truncf %15 : vector<8x128xf32> to vector<8x128xbf16>
    %cst_20 = arith.constant dense<0.000000e+00> : vector<8x128xf32>
    %19 = tpu.matmul %18, %16, %cst_20 {dimension_numbers = #tpu.dot_dimension_numbers<[1], [0], [0], [1], [0, 0, 1, 1], [], []>} : vector<8x128xbf16>, vector<128x128xbf16>, vector<8x128xf32> -> vector<8x128xf32>
    %20 = vector.broadcast %17 : vector<1x128xf32> to vector<8x128xf32>
    %21 = arith.addf %19, %20 : vector<8x128xf32>
    %cst_21 = arith.constant 0.176776692 : f32
    %22 = vector.broadcast %cst_21 : f32 to vector<8x128xf32>
    %23 = arith.mulf %21, %22 : vector<8x128xf32>
    %24 = arith.truncf %23 : vector<8x128xf32> to vector<8x128xbf16>
    %25 = arith.truncf %21 : vector<8x128xf32> to vector<8x128xbf16>
    "tpu.trace_start"() <{level = 10 : i32, message = "qd,kd->qk"}> : () -> ()
    %cst_22 = arith.constant dense<0.000000e+00> : vector<8x8xf32>
    %26 = tpu.matmul %24, %25, %cst_22 {dimension_numbers = #tpu.dot_dimension_numbers<[1], [1], [0], [0], [0, 0, 1, 0], [], []>} : vector<8x128xbf16>, vector<8x128xbf16>, vector<8x8xf32> -> vector<8x8xf32>
    "tpu.trace_stop"() : () -> ()
    %cst_23 = arith.constant dense<0xFF800000> : vector<8xf32>
    %27 = vector.multi_reduction <maximumf>, %26, %cst_23 [1] : vector<8x8xf32> to vector<8xf32>
    %28 = vector.shape_cast %27 : vector<8xf32> to vector<8x1xf32>
    %29 = vector.broadcast %28 : vector<8x1xf32> to vector<8x8xf32>
    %30 = arith.subf %26, %29 : vector<8x8xf32>
    %31 = math.exp %30 : vector<8x8xf32>
    %cst_24 = arith.constant dense<0.000000e+00> : vector<8xf32>
    %32 = vector.multi_reduction <add>, %31, %cst_24 [1] : vector<8x8xf32> to vector<8xf32>
    %33 = vector.shape_cast %32 : vector<8xf32> to vector<8x1xf32>
    %cst_25 = arith.constant 1.000000e+00 : f32
    %34 = vector.broadcast %cst_25 : f32 to vector<8x1xf32>
    %35 = arith.divf %34, %33 : vector<8x1xf32>
    %36 = vector.broadcast %35 : vector<8x1xf32> to vector<8x8xf32>
    %37 = arith.mulf %31, %36 : vector<8x8xf32>
    %38 = arith.truncf %37 : vector<8x8xf32> to vector<8x8xbf16>
    %39 = arith.truncf %21 : vector<8x128xf32> to vector<8x128xbf16>
    "tpu.trace_start"() <{level = 10 : i32, message = "qk,kd->qd"}> : () -> ()
    %cst_26 = arith.constant dense<0.000000e+00> : vector<8x128xf32>
    %40 = tpu.matmul %38, %39, %cst_26 {dimension_numbers = #tpu.dot_dimension_numbers<[1], [0], [0], [1], [0, 0, 1, 1], [], []>} : vector<8x8xbf16>, vector<8x128xbf16>, vector<8x128xf32> -> vector<8x128xf32>
    "tpu.trace_stop"() : () -> ()
    %c0_27 = arith.constant 0 : index
    %c0_28 = arith.constant 0 : index
    %41 = vector.load %arg9[%c0_27, %c0_28] : memref<3x128xf32, #tpu.memory_space<vmem>>, vector<3x128xf32>
    %cst_29 = arith.constant dense<0.000000e+00> : vector<8x128xf32>
    %42 = tpu.matmul %1, %41, %cst_29 {dimension_numbers = #tpu.dot_dimension_numbers<[1], [0], [0], [1], [0, 0, 1, 1], [], []>} : vector<8x3xf32>, vector<3x128xf32>, vector<8x128xf32> -> vector<8x128xf32>
    %c0_30 = arith.constant 0 : index
    %c0_31 = arith.constant 0 : index
    %43 = vector.load %arg10[%c0_30, %c0_31] : memref<1x128xf32, #tpu.memory_space<vmem>>, vector<1x128xf32>
    %44 = vector.broadcast %43 : vector<1x128xf32> to vector<8x128xf32>
    %45 = arith.addf %42, %44 : vector<8x128xf32>
    %cst_32 = arith.constant 0.000000e+00 : f32
    %46 = vector.broadcast %cst_32 : f32 to vector<8x128xf32>
    %47 = arith.maximumf %45, %46 : vector<8x128xf32>
    %c0_33 = arith.constant 0 : index
    %c0_34 = arith.constant 0 : index
    %48 = vector.load %arg11[%c0_33, %c0_34] : memref<128x128xbf16, #tpu.memory_space<vmem>>, vector<128x128xbf16>
    %c0_35 = arith.constant 0 : index
    %c0_36 = arith.constant 0 : index
    %49 = vector.load %arg12[%c0_35, %c0_36] : memref<1x128xf32, #tpu.memory_space<vmem>>, vector<1x128xf32>
    %50 = arith.truncf %47 : vector<8x128xf32> to vector<8x128xbf16>
    %cst_37 = arith.constant dense<0.000000e+00> : vector<8x128xf32>
    %51 = tpu.matmul %50, %48, %cst_37 {dimension_numbers = #tpu.dot_dimension_numbers<[1], [0], [0], [1], [0, 0, 1, 1], [], []>} : vector<8x128xbf16>, vector<128x128xbf16>, vector<8x128xf32> -> vector<8x128xf32>
    %52 = vector.broadcast %49 : vector<1x128xf32> to vector<8x128xf32>
    %53 = arith.addf %51, %52 : vector<8x128xf32>
    %c0_38 = arith.constant 0 : index
    %c0_39 = arith.constant 0 : index
    %54 = vector.load %arg13[%c0_38, %c0_39] : memref<3x128xf32, #tpu.memory_space<vmem>>, vector<3x128xf32>
    %cst_40 = arith.constant dense<0.000000e+00> : vector<8x128xf32>
    %55 = tpu.matmul %5, %54, %cst_40 {dimension_numbers = #tpu.dot_dimension_numbers<[1], [0], [0], [1], [0, 0, 1, 1], [], []>} : vector<8x3xf32>, vector<3x128xf32>, vector<8x128xf32> -> vector<8x128xf32>
    %c0_41 = arith.constant 0 : index
    %c0_42 = arith.constant 0 : index
    %56 = vector.load %arg14[%c0_41, %c0_42] : memref<1x128xf32, #tpu.memory_space<vmem>>, vector<1x128xf32>
    %57 = vector.broadcast %56 : vector<1x128xf32> to vector<8x128xf32>
    %58 = arith.addf %55, %57 : vector<8x128xf32>
    %cst_43 = arith.constant 0.000000e+00 : f32
    %59 = vector.broadcast %cst_43 : f32 to vector<8x128xf32>
    %60 = arith.maximumf %58, %59 : vector<8x128xf32>
    %c0_44 = arith.constant 0 : index
    %c0_45 = arith.constant 0 : index
    %61 = vector.load %arg15[%c0_44, %c0_45] : memref<128x128xbf16, #tpu.memory_space<vmem>>, vector<128x128xbf16>
    %c0_46 = arith.constant 0 : index
    %c0_47 = arith.constant 0 : index
    %62 = vector.load %arg16[%c0_46, %c0_47] : memref<1x128xf32, #tpu.memory_space<vmem>>, vector<1x128xf32>
    %63 = arith.truncf %60 : vector<8x128xf32> to vector<8x128xbf16>
    %cst_48 = arith.constant dense<0.000000e+00> : vector<8x128xf32>
    %64 = tpu.matmul %63, %61, %cst_48 {dimension_numbers = #tpu.dot_dimension_numbers<[1], [0], [0], [1], [0, 0, 1, 1], [], []>} : vector<8x128xbf16>, vector<128x128xbf16>, vector<8x128xf32> -> vector<8x128xf32>
    %65 = vector.broadcast %62 : vector<1x128xf32> to vector<8x128xf32>
    %66 = arith.addf %64, %65 : vector<8x128xf32>
    %67 = arith.truncf %66 : vector<8x128xf32> to vector<8x128xbf16>
    %68 = arith.truncf %53 : vector<8x128xf32> to vector<8x128xbf16>
    "tpu.trace_start"() <{level = 10 : i32, message = "qd,kd->qk"}> : () -> ()
    %cst_49 = arith.constant dense<0.000000e+00> : vector<8x8xf32>
    %69 = tpu.matmul %67, %68, %cst_49 {dimension_numbers = #tpu.dot_dimension_numbers<[1], [1], [0], [0], [0, 0, 1, 0], [], []>} : vector<8x128xbf16>, vector<8x128xbf16>, vector<8x8xf32> -> vector<8x8xf32>
    "tpu.trace_stop"() : () -> ()
    %cst_50 = arith.constant dense<0xFF800000> : vector<8xf32>
    %70 = vector.multi_reduction <maximumf>, %69, %cst_50 [1] : vector<8x8xf32> to vector<8xf32>
    %71 = vector.shape_cast %70 : vector<8xf32> to vector<8x1xf32>
    %72 = vector.broadcast %71 : vector<8x1xf32> to vector<8x8xf32>
    %73 = arith.subf %69, %72 : vector<8x8xf32>
    %74 = math.exp %73 : vector<8x8xf32>
    %cst_51 = arith.constant dense<0.000000e+00> : vector<8xf32>
    %75 = vector.multi_reduction <add>, %74, %cst_51 [1] : vector<8x8xf32> to vector<8xf32>
    %76 = vector.shape_cast %75 : vector<8xf32> to vector<8x1xf32>
    %cst_52 = arith.constant 1.000000e+00 : f32
    %77 = vector.broadcast %cst_52 : f32 to vector<8x1xf32>
    %78 = arith.divf %77, %76 : vector<8x1xf32>
    %79 = vector.broadcast %78 : vector<8x1xf32> to vector<8x8xf32>
    %80 = arith.mulf %74, %79 : vector<8x8xf32>
    %81 = arith.truncf %80 : vector<8x8xf32> to vector<8x8xbf16>
    %82 = arith.truncf %40 : vector<8x128xf32> to vector<8x128xbf16>
    "tpu.trace_start"() <{level = 10 : i32, message = "qk,kd->qd"}> : () -> ()
    %cst_53 = arith.constant dense<0.000000e+00> : vector<8x128xf32>
    %83 = tpu.matmul %81, %82, %cst_53 {dimension_numbers = #tpu.dot_dimension_numbers<[1], [0], [0], [1], [0, 0, 1, 1], [], []>} : vector<8x8xbf16>, vector<8x128xbf16>, vector<8x128xf32> -> vector<8x128xf32>
    "tpu.trace_stop"() : () -> ()
    %c0_54 = arith.constant 0 : index
    %c0_55 = arith.constant 0 : index
    %c0_56 = arith.constant 0 : index
    %84 = vector.load %arg17[%c0_54, %c0_55, %c0_56] : memref<1x8x128xf32, #tpu.memory_space<vmem>>, vector<1x8x128xf32>
    %85 = vector.shape_cast %84 : vector<1x8x128xf32> to vector<8x128xf32>
    %86 = vector.shape_cast %83 : vector<8x128xf32> to vector<1x8x128xf32>
    tpu.vector_store %arg17[%c0_54, %c0_55, %c0_56], %86 {strides = array<i32>} : memref<1x8x128xf32, #tpu.memory_space<vmem>>, vector<1x8x128xf32>,
    return
  }
  func.func @transform_0(%arg0: i32) -> (i32, i32, i32) {
    %c0_i32 = arith.constant 0 : i32
    %c0_i32_0 = arith.constant 0 : i32
    %c0_i32_1 = arith.constant 0 : i32
    return %arg0, %c0_i32, %c0_i32_0 : i32, i32, i32
  }
  func.func @transform_1(%arg0: i32) -> (i32, i32, i32) {
    %c0_i32 = arith.constant 0 : i32
    %c0_i32_0 = arith.constant 0 : i32
    %c0_i32_1 = arith.constant 0 : i32
    return %arg0, %c0_i32, %c0_i32_0 : i32, i32, i32
  }
  func.func @transform_2(%arg0: i32) -> (i32, i32, i32) {
    %c0_i32 = arith.constant 0 : i32
    %c0_i32_0 = arith.constant 0 : i32
    %c0_i32_1 = arith.constant 0 : i32
    return %arg0, %c0_i32, %c0_i32_0 : i32, i32, i32
  }
  func.func @transform_3(%arg0: i32) -> (i32, i32) {
    %c0_i32 = arith.constant 0 : i32
    %c0_i32_0 = arith.constant 0 : i32
    %c0_i32_1 = arith.constant 0 : i32
    return %c0_i32, %c0_i32_0 : i32, i32
  }
  func.func @transform_4(%arg0: i32) -> (i32, i32) {
    %c0_i32 = arith.constant 0 : i32
    %c0_i32_0 = arith.constant 0 : i32
    %c0_i32_1 = arith.constant 0 : i32
    return %c0_i32, %c0_i32_0 : i32, i32
  }
  func.func @transform_5(%arg0: i32) -> (i32, i32) {
    %c0_i32 = arith.constant 0 : i32
    %c0_i32_0 = arith.constant 0 : i32
    %c0_i32_1 = arith.constant 0 : i32
    return %c0_i32, %c0_i32_0 : i32, i32
  }
  func.func @transform_6(%arg0: i32) -> (i32, i32) {
    %c0_i32 = arith.constant 0 : i32
    %c0_i32_0 = arith.constant 0 : i32
    %c0_i32_1 = arith.constant 0 : i32
    return %c0_i32, %c0_i32_0 : i32, i32
  }
  func.func @transform_7(%arg0: i32) -> (i32, i32) {
    %c0_i32 = arith.constant 0 : i32
    %c0_i32_0 = arith.constant 0 : i32
    %c0_i32_1 = arith.constant 0 : i32
    return %c0_i32, %c0_i32_0 : i32, i32
  }
  func.func @transform_8(%arg0: i32) -> (i32, i32) {
    %c0_i32 = arith.constant 0 : i32
    %c0_i32_0 = arith.constant 0 : i32
    %c0_i32_1 = arith.constant 0 : i32
    return %c0_i32, %c0_i32_0 : i32, i32
  }
  func.func @transform_9(%arg0: i32) -> (i32, i32) {
    %c0_i32 = arith.constant 0 : i32
    %c0_i32_0 = arith.constant 0 : i32
    %c0_i32_1 = arith.constant 0 : i32
    return %c0_i32, %c0_i32_0 : i32, i32
  }
  func.func @transform_10(%arg0: i32) -> (i32, i32) {
    %c0_i32 = arith.constant 0 : i32
    %c0_i32_0 = arith.constant 0 : i32
    %c0_i32_1 = arith.constant 0 : i32
    return %c0_i32, %c0_i32_0 : i32, i32
  }
  func.func @transform_11(%arg0: i32) -> (i32, i32) {
    %c0_i32 = arith.constant 0 : i32
    %c0_i32_0 = arith.constant 0 : i32
    %c0_i32_1 = arith.constant 0 : i32
    return %c0_i32, %c0_i32_0 : i32, i32
  }
  func.func @transform_12(%arg0: i32) -> (i32, i32) {
    %c0_i32 = arith.constant 0 : i32
    %c0_i32_0 = arith.constant 0 : i32
    %c0_i32_1 = arith.constant 0 : i32
    return %c0_i32, %c0_i32_0 : i32, i32
  }
  func.func @transform_13(%arg0: i32) -> (i32, i32) {
    %c0_i32 = arith.constant 0 : i32
    %c0_i32_0 = arith.constant 0 : i32
    %c0_i32_1 = arith.constant 0 : i32
    return %c0_i32, %c0_i32_0 : i32, i32
  }
  func.func @transform_14(%arg0: i32) -> (i32, i32) {
    %c0_i32 = arith.constant 0 : i32
    %c0_i32_0 = arith.constant 0 : i32
    %c0_i32_1 = arith.constant 0 : i32
    return %c0_i32, %c0_i32_0 : i32, i32
  }
  func.func @transform_15(%arg0: i32) -> (i32, i32) {
    %c0_i32 = arith.constant 0 : i32
    %c0_i32_0 = arith.constant 0 : i32
    %c0_i32_1 = arith.constant 0 : i32
    return %c0_i32, %c0_i32_0 : i32, i32
  }
  func.func @transform_16(%arg0: i32) -> (i32, i32, i32) {
    %c0_i32 = arith.constant 0 : i32
    %c0_i32_0 = arith.constant 0 : i32
    %c0_i32_1 = arith.constant 0 : i32
    return %arg0, %c0_i32, %c0_i32_0 : i32, i32, i32
  }
}

</mosaic_0001>

<llo_original>
// kernel: tpu_custom_call.1
$region0: #{tpu_custom_call.1}
  #allocation0 [shape = 'u32[]', space=smem, size = 0x4, offset = 0x4, fixed_abs, tag = 'smem constant byte address 0x4 - core index']
  #allocation1 [shape = 'u32[144,128]{1,0:T(1,128)}', space=vmem, size = 0x12000, scoped, tag = 'internal scratch']
  %s0 = inlined_call_operand.vmem [shape: f32[2,8,3], index: 0, kind: input, shape index: {}]
  %s1 = inlined_call_operand.vmem [shape: f32[2,8,2], index: 1, kind: input, shape index: {}]
  %s2 = inlined_call_operand.vmem [shape: f32[2,8,3], index: 2, kind: input, shape index: {}]
  %s3 = inlined_call_operand.vmem [shape: f32[3,128], index: 3, kind: input, shape index: {}]
  %s4 = inlined_call_operand.hbm [shape: f32[2,128], index: 4, kind: input, shape index: {}]
  %s5 = inlined_call_operand.hbm [shape: f32[1,128], index: 5, kind: input, shape index: {}]
  %s6 = inlined_call_operand.vmem [shape: bf16[128,128], index: 6, kind: input, shape index: {}]
  %s7 = inlined_call_operand.hbm [shape: f32[1,128], index: 7, kind: input, shape index: {}]
  %s8 = inlined_call_operand.vmem [shape: f32[3,128], index: 8, kind: input, shape index: {}]
  %s9 = inlined_call_operand.vmem [shape: f32[1,128], index: 9, kind: input, shape index: {}]
  %s10 = inlined_call_operand.hbm [shape: bf16[128,128], index: 10, kind: input, shape index: {}]
  %s11 = inlined_call_operand.vmem [shape: f32[1,128], index: 11, kind: input, shape index: {}]
  %s12 = inlined_call_operand.vmem [shape: f32[3,128], index: 12, kind: input, shape index: {}]
  %s13 = inlined_call_operand.vmem [shape: f32[1,128], index: 13, kind: input, shape index: {}]
  %s14 = inlined_call_operand.hbm [shape: bf16[128,128], index: 14, kind: input, shape index: {}]
  %s15 = inlined_call_operand.vmem [shape: f32[1,128], index: 15, kind: input, shape index: {}]
  %s16 = inlined_call_operand.hbm [shape: f32[2,8,128], index: 16, kind: output, shape index: {}]
  %s17 = sld [smem:[#allocation0]]
  $region117: #{tpu_custom_call.1} parent=0
    _
  %s19 = ssub.s32 1, %s17
  %s20 = scalar_select 0, %s19, %s17
  $region1: #{tpu_custom_call.1} parent=0
    #allocation2 [shape = 'u8[1024]{0}', space=vmem, size = 0x400, scoped, tag = 'input window, operand 4, single buffered']
    #allocation3 [shape = 's32[2]{0}', space=sflag, size = 0x8, scoped, tag = 'scoped memory for tpu_custom_call.1']
    #allocation4 [shape = 's32[2]{0}', space=sflag, size = 0x8, scoped, tag = 'scoped memory for tpu_custom_call.1']
    #allocation5 [shape = 'u8[512]{0}', space=vmem, size = 0x400, scoped, tag = 'input window, operand 5, single buffered']
    #allocation6 [shape = 's32[1]{0}', space=sflag, size = 0x4, scoped, tag = 'scoped memory for tpu_custom_call.1']
    #allocation7 [shape = 'u8[512]{0}', space=vmem, size = 0x400, scoped, tag = 'input window, operand 7, single buffered']
    #allocation8 [shape = 'u8[32768]{0}', space=vmem, size = 0x8000, scoped, tag = 'input window, operand 10, single buffered']
    #allocation9 [shape = 's32[1]{0}', space=sflag, size = 0x4, scoped, tag = 'scoped memory for tpu_custom_call.1']
    #allocation10 [shape = 'u8[32768]{0}', space=vmem, size = 0x8000, scoped, tag = 'input window, operand 14, single buffered']
    #allocation11 [shape = 'u8[8192]{0}', space=vmem, size = 0x2000, scoped, tag = 'output window, operand 0']
    %21 = vsyncpa [#allocation3], 0
    %22 = vsyncpa [#allocation6], 0
    %23 = vsyncpa [#allocation9], 0
    %24 = vsyncpa [#allocation4], 0
    %s25 = scalar_lea.sflag [#allocation4], 1
    %26 = vsyncpa %s25, 0
    loop: start=0, step=1, limit=4
    $region2: #{tpu_custom_call.1} parent=1 // loop_pre_header
      _
    $region3: #{tpu_custom_call.1} parent=1 // loop_header
      %s28 = sphi 0, %s32
      %p29 = scmp.ge.s32.totalorder %s28, 4
      %s38 = sphi 0, %s40
      %s41 = sphi 0, %s38
      %s42 = sphi 0, %s41
      %s58 = sphi 0, %s42
      %s64 = sphi 0, %s66
      %s67 = sphi 0, %s64
      %s68 = sphi 0, %s67
      %s84 = sphi 0, %s68
      %s90 = sphi 0, %s92
      %s93 = sphi 0, %s90
      %s94 = sphi 0, %s93
      %s110 = sphi 0, %s94
      %s114 = sphi 0, %s114
      %s116 = sphi 0, %s114
      %s117 = sphi 0, %s116
      %s131 = sphi 0, %s117
      %s135 = sphi 0, %s135
      %s137 = sphi 0, %s135
      %s138 = sphi 0, %s137
      %s152 = sphi 0, %s138
      %s156 = sphi 0, %s156
      %s158 = sphi 0, %s156
      %s159 = sphi 0, %s158
      %s173 = sphi 0, %s159
      %s177 = sphi 0, %s177
      %s179 = sphi 0, %s177
      %s180 = sphi 0, %s179
      %s194 = sphi 0, %s180
      %s198 = sphi 0, %s198
      %s200 = sphi 0, %s198
      %s201 = sphi 0, %s200
      %s215 = sphi 0, %s201
      %s219 = sphi 0, %s219
      %s221 = sphi 0, %s219
      %s222 = sphi 0, %s221
      %s236 = sphi 0, %s222
      %s240 = sphi 0, %s240
      %s242 = sphi 0, %s240
      %s243 = sphi 0, %s242
      %s257 = sphi 0, %s243
      %s261 = sphi 0, %s261
      %s263 = sphi 0, %s261
      %s264 = sphi 0, %s263
      %s278 = sphi 0, %s264
      %s282 = sphi 0, %s282
      %s284 = sphi 0, %s282
      %s285 = sphi 0, %s284
      %s299 = sphi 0, %s285
      %s303 = sphi 0, %s303
      %s305 = sphi 0, %s303
      %s306 = sphi 0, %s305
      %s320 = sphi 0, %s306
      %s324 = sphi 0, %s324
      %s326 = sphi 0, %s324
      %s327 = sphi 0, %s326
      %s341 = sphi 0, %s327
      %s345 = sphi 0, %s345
      %s347 = sphi 0, %s345
      %s348 = sphi 0, %s347
      %s362 = sphi 0, %s348
      %s366 = sphi 0, %s366
      %s368 = sphi 0, %s366
      %s369 = sphi 0, %s368
      %s383 = sphi 0, %s369
      %s389 = sphi 0, %s391
      %s392 = sphi 0, %s389
      %s393 = sphi 0, %s392
      %s409 = sphi 0, %s393
    $region4: #{tpu_custom_call.1} parent=1 // loop_header_branch
      %31 = sbr.rel (%p29) target = $region8
    $region5: #{tpu_custom_call.1} parent=1 // loop_body
      %s33 = ssub.s32 %s28, 1
      %s34 = ssub.s32 %s28, 2
      %s35 = sadd.s32 %s28, 1
      %s36 = ssub.s32 %s28, %s35
      %p37 = scmp.eq.s32.totalorder %s36, 0
      %s39 = sadd.s32 %s38, 1
      %s40 = scalar_select %p37, %s38, %s39
      %p43 = pneg %p37
      %p44 = scmp.eq.s32.totalorder %s28, 1
      %p45 = por %p43, %p44
      %p46 = scmp.ne.s32.totalorder %s38, %s41
      %p47 = scmp.eq.s32.totalorder %s28, 0
      %p48 = por %p46, %p47
      %p49 = scmp.ne.s32.totalorder %s38, %s41
      %p50 = scmp.eq.s32.totalorder %s33, 1
      %p51 = por %p49, %p50
      %p52 = scmp.ne.s32.totalorder %s41, %s42
      %p53 = scmp.eq.s32.totalorder %s33, 0
      %p54 = por %p52, %p53
      %p55 = scmp.ne.s32.totalorder %s41, %s42
      %p56 = scmp.eq.s32.totalorder %s34, 1
      %p57 = por %p55, %p56
      %p59 = scmp.ne.s32.totalorder %s42, %s58
      %p60 = scmp.eq.s32.totalorder %s34, 0
      %p61 = por %p59, %p60
      %s62 = ssub.s32 %s28, %s35
      %p63 = scmp.eq.s32.totalorder %s62, 0
      %s65 = sadd.s32 %s64, 1
      %s66 = scalar_select %p63, %s64, %s65
      %p69 = pneg %p63
      %p70 = scmp.eq.s32.totalorder %s28, 1
      %p71 = por %p69, %p70
      %p72 = scmp.ne.s32.totalorder %s64, %s67
      %p73 = scmp.eq.s32.totalorder %s28, 0
      %p74 = por %p72, %p73
      %p75 = scmp.ne.s32.totalorder %s64, %s67
      %p76 = scmp.eq.s32.totalorder %s33, 1
      %p77 = por %p75, %p76
      %p78 = scmp.ne.s32.totalorder %s67, %s68
      %p79 = scmp.eq.s32.totalorder %s33, 0
      %p80 = por %p78, %p79
      %p81 = scmp.ne.s32.totalorder %s67, %s68
      %p82 = scmp.eq.s32.totalorder %s34, 1
      %p83 = por %p81, %p82
      %p85 = scmp.ne.s32.totalorder %s68, %s84
      %p86 = scmp.eq.s32.totalorder %s34, 0
      %p87 = por %p85, %p86
      %s88 = ssub.s32 %s28, %s35
      %p89 = scmp.eq.s32.totalorder %s88, 0
      %s91 = sadd.s32 %s90, 1
      %s92 = scalar_select %p89, %s90, %s91
      %p95 = pneg %p89
      %p96 = scmp.eq.s32.totalorder %s28, 1
      %p97 = por %p95, %p96
      %p98 = scmp.ne.s32.totalorder %s90, %s93
      %p99 = scmp.eq.s32.totalorder %s28, 0
      %p100 = por %p98, %p99
      %p101 = scmp.ne.s32.totalorder %s90, %s93
      %p102 = scmp.eq.s32.totalorder %s33, 1
      %p103 = por %p101, %p102
      %p104 = scmp.ne.s32.totalorder %s93, %s94
      %p105 = scmp.eq.s32.totalorder %s33, 0
      %p106 = por %p104, %p105
      %p107 = scmp.ne.s32.totalorder %s93, %s94
      %p108 = scmp.eq.s32.totalorder %s34, 1
      %p109 = por %p107, %p108
      %p111 = scmp.ne.s32.totalorder %s94, %s110
      %p112 = scmp.eq.s32.totalorder %s34, 0
      %p113 = por %p111, %p112
      %s115 = sadd.s32 %s114, 1
      %p118 = scmp.eq.s32.totalorder %s28, 1
      %p119 = scmp.ne.s32.totalorder %s114, %s116
      %p120 = scmp.eq.s32.totalorder %s28, 0
      %p121 = por %p119, %p120
      %p122 = scmp.ne.s32.totalorder %s114, %s116
      %p123 = scmp.eq.s32.totalorder %s33, 1
      %p124 = por %p122, %p123
      %p125 = scmp.ne.s32.totalorder %s116, %s117
      %p126 = scmp.eq.s32.totalorder %s33, 0
      %p127 = por %p125, %p126
      %p128 = scmp.ne.s32.totalorder %s116, %s117
      %p129 = scmp.eq.s32.totalorder %s34, 1
      %p130 = por %p128, %p129
      %p132 = scmp.ne.s32.totalorder %s117, %s131
      %p133 = scmp.eq.s32.totalorder %s34, 0
      %p134 = por %p132, %p133
      %s136 = sadd.s32 %s135, 1
      %p139 = scmp.eq.s32.totalorder %s28, 1
      %p140 = scmp.ne.s32.totalorder %s135, %s137
      %p141 = scmp.eq.s32.totalorder %s28, 0
      %p142 = por %p140, %p141
      %p143 = scmp.ne.s32.totalorder %s135, %s137
      %p144 = scmp.eq.s32.totalorder %s33, 1
      %p145 = por %p143, %p144
      %p146 = scmp.ne.s32.totalorder %s137, %s138
      %p147 = scmp.eq.s32.totalorder %s33, 0
      %p148 = por %p146, %p147
      %p149 = scmp.ne.s32.totalorder %s137, %s138
      %p150 = scmp.eq.s32.totalorder %s34, 1
      %p151 = por %p149, %p150
      %p153 = scmp.ne.s32.totalorder %s138, %s152
      %p154 = scmp.eq.s32.totalorder %s34, 0
      %p155 = por %p153, %p154
      %s157 = sadd.s32 %s156, 1
      %p160 = scmp.eq.s32.totalorder %s28, 1
      %p161 = scmp.ne.s32.totalorder %s156, %s158
      %p162 = scmp.eq.s32.totalorder %s28, 0
      %p163 = por %p161, %p162
      %p164 = scmp.ne.s32.totalorder %s156, %s158
      %p165 = scmp.eq.s32.totalorder %s33, 1
      %p166 = por %p164, %p165
      %p167 = scmp.ne.s32.totalorder %s158, %s159
      %p168 = scmp.eq.s32.totalorder %s33, 0
      %p169 = por %p167, %p168
      %p170 = scmp.ne.s32.totalorder %s158, %s159
      %p171 = scmp.eq.s32.totalorder %s34, 1
      %p172 = por %p170, %p171
      %p174 = scmp.ne.s32.totalorder %s159, %s173
      %p175 = scmp.eq.s32.totalorder %s34, 0
      %p176 = por %p174, %p175
      %s178 = sadd.s32 %s177, 1
      %p181 = scmp.eq.s32.totalorder %s28, 1
      %p182 = scmp.ne.s32.totalorder %s177, %s179
      %p183 = scmp.eq.s32.totalorder %s28, 0
      %p184 = por %p182, %p183
      %p185 = scmp.ne.s32.totalorder %s177, %s179
      %p186 = scmp.eq.s32.totalorder %s33, 1
      %p187 = por %p185, %p186
      %p188 = scmp.ne.s32.totalorder %s179, %s180
      %p189 = scmp.eq.s32.totalorder %s33, 0
      %p190 = por %p188, %p189
      %p191 = scmp.ne.s32.totalorder %s179, %s180
      %p192 = scmp.eq.s32.totalorder %s34, 1
      %p193 = por %p191, %p192
      %p195 = scmp.ne.s32.totalorder %s180, %s194
      %p196 = scmp.eq.s32.totalorder %s34, 0
      %p197 = por %p195, %p196
      %s199 = sadd.s32 %s198, 1
      %p202 = scmp.eq.s32.totalorder %s28, 1
      %p203 = scmp.ne.s32.totalorder %s198, %s200
      %p204 = scmp.eq.s32.totalorder %s28, 0
      %p205 = por %p203, %p204
      %p206 = scmp.ne.s32.totalorder %s198, %s200
      %p207 = scmp.eq.s32.totalorder %s33, 1
      %p208 = por %p206, %p207
      %p209 = scmp.ne.s32.totalorder %s200, %s201
      %p210 = scmp.eq.s32.totalorder %s33, 0
      %p211 = por %p209, %p210
      %p212 = scmp.ne.s32.totalorder %s200, %s201
      %p213 = scmp.eq.s32.totalorder %s34, 1
      %p214 = por %p212, %p213
      %p216 = scmp.ne.s32.totalorder %s201, %s215
      %p217 = scmp.eq.s32.totalorder %s34, 0
      %p218 = por %p216, %p217
      %s220 = sadd.s32 %s219, 1
      %p223 = scmp.eq.s32.totalorder %s28, 1
      %p224 = scmp.ne.s32.totalorder %s219, %s221
      %p225 = scmp.eq.s32.totalorder %s28, 0
      %p226 = por %p224, %p225
      %p227 = scmp.ne.s32.totalorder %s219, %s221
      %p228 = scmp.eq.s32.totalorder %s33, 1
      %p229 = por %p227, %p228
      %p230 = scmp.ne.s32.totalorder %s221, %s222
      %p231 = scmp.eq.s32.totalorder %s33, 0
      %p232 = por %p230, %p231
      %p233 = scmp.ne.s32.totalorder %s221, %s222
      %p234 = scmp.eq.s32.totalorder %s34, 1
      %p235 = por %p233, %p234
      %p237 = scmp.ne.s32.totalorder %s222, %s236
      %p238 = scmp.eq.s32.totalorder %s34, 0
      %p239 = por %p237, %p238
      %s241 = sadd.s32 %s240, 1
      %p244 = scmp.eq.s32.totalorder %s28, 1
      %p245 = scmp.ne.s32.totalorder %s240, %s242
      %p246 = scmp.eq.s32.totalorder %s28, 0
      %p247 = por %p245, %p246
      %p248 = scmp.ne.s32.totalorder %s240, %s242
      %p249 = scmp.eq.s32.totalorder %s33, 1
      %p250 = por %p248, %p249
      %p251 = scmp.ne.s32.totalorder %s242, %s243
      %p252 = scmp.eq.s32.totalorder %s33, 0
      %p253 = por %p251, %p252
      %p254 = scmp.ne.s32.totalorder %s242, %s243
      %p255 = scmp.eq.s32.totalorder %s34, 1
      %p256 = por %p254, %p255
      %p258 = scmp.ne.s32.totalorder %s243, %s257
      %p259 = scmp.eq.s32.totalorder %s34, 0
      %p260 = por %p258, %p259
      %s262 = sadd.s32 %s261, 1
      %p265 = scmp.eq.s32.totalorder %s28, 1
      %p266 = scmp.ne.s32.totalorder %s261, %s263
      %p267 = scmp.eq.s32.totalorder %s28, 0
      %p268 = por %p266, %p267
      %p269 = scmp.ne.s32.totalorder %s261, %s263
      %p270 = scmp.eq.s32.totalorder %s33, 1
      %p271 = por %p269, %p270
      %p272 = scmp.ne.s32.totalorder %s263, %s264
      %p273 = scmp.eq.s32.totalorder %s33, 0
      %p274 = por %p272, %p273
      %p275 = scmp.ne.s32.totalorder %s263, %s264
      %p276 = scmp.eq.s32.totalorder %s34, 1
      %p277 = por %p275, %p276
      %p279 = scmp.ne.s32.totalorder %s264, %s278
      %p280 = scmp.eq.s32.totalorder %s34, 0
      %p281 = por %p279, %p280
      %s283 = sadd.s32 %s282, 1
      %p286 = scmp.eq.s32.totalorder %s28, 1
      %p287 = scmp.ne.s32.totalorder %s282, %s284
      %p288 = scmp.eq.s32.totalorder %s28, 0
      %p289 = por %p287, %p288
      %p290 = scmp.ne.s32.totalorder %s282, %s284
      %p291 = scmp.eq.s32.totalorder %s33, 1
      %p292 = por %p290, %p291
      %p293 = scmp.ne.s32.totalorder %s284, %s285
      %p294 = scmp.eq.s32.totalorder %s33, 0
      %p295 = por %p293, %p294
      %p296 = scmp.ne.s32.totalorder %s284, %s285
      %p297 = scmp.eq.s32.totalorder %s34, 1
      %p298 = por %p296, %p297
      %p300 = scmp.ne.s32.totalorder %s285, %s299
      %p301 = scmp.eq.s32.totalorder %s34, 0
      %p302 = por %p300, %p301
      %s304 = sadd.s32 %s303, 1
      %p307 = scmp.eq.s32.totalorder %s28, 1
      %p308 = scmp.ne.s32.totalorder %s303, %s305
      %p309 = scmp.eq.s32.totalorder %s28, 0
      %p310 = por %p308, %p309
      %p311 = scmp.ne.s32.totalorder %s303, %s305
      %p312 = scmp.eq.s32.totalorder %s33, 1
      %p313 = por %p311, %p312
      %p314 = scmp.ne.s32.totalorder %s305, %s306
      %p315 = scmp.eq.s32.totalorder %s33, 0
      %p316 = por %p314, %p315
      %p317 = scmp.ne.s32.totalorder %s305, %s306
      %p318 = scmp.eq.s32.totalorder %s34, 1
      %p319 = por %p317, %p318
      %p321 = scmp.ne.s32.totalorder %s306, %s320
      %p322 = scmp.eq.s32.totalorder %s34, 0
      %p323 = por %p321, %p322
      %s325 = sadd.s32 %s324, 1
      %p328 = scmp.eq.s32.totalorder %s28, 1
      %p329 = scmp.ne.s32.totalorder %s324, %s326
      %p330 = scmp.eq.s32.totalorder %s28, 0
      %p331 = por %p329, %p330
      %p332 = scmp.ne.s32.totalorder %s324, %s326
      %p333 = scmp.eq.s32.totalorder %s33, 1
      %p334 = por %p332, %p333
      %p335 = scmp.ne.s32.totalorder %s326, %s327
      %p336 = scmp.eq.s32.totalorder %s33, 0
      %p337 = por %p335, %p336
      %p338 = scmp.ne.s32.totalorder %s326, %s327
      %p339 = scmp.eq.s32.totalorder %s34, 1
      %p340 = por %p338, %p339
      %p342 = scmp.ne.s32.totalorder %s327, %s341
      %p343 = scmp.eq.s32.totalorder %s34, 0
      %p344 = por %p342, %p343
      %s346 = sadd.s32 %s345, 1
      %p349 = scmp.eq.s32.totalorder %s28, 1
      %p350 = scmp.ne.s32.totalorder %s345, %s347
      %p351 = scmp.eq.s32.totalorder %s28, 0
      %p352 = por %p350, %p351
      %p353 = scmp.ne.s32.totalorder %s345, %s347
      %p354 = scmp.eq.s32.totalorder %s33, 1
      %p355 = por %p353, %p354
      %p356 = scmp.ne.s32.totalorder %s347, %s348
      %p357 = scmp.eq.s32.totalorder %s33, 0
      %p358 = por %p356, %p357
      %p359 = scmp.ne.s32.totalorder %s347, %s348
      %p360 = scmp.eq.s32.totalorder %s34, 1
      %p361 = por %p359, %p360
      %p363 = scmp.ne.s32.totalorder %s348, %s362
      %p364 = scmp.eq.s32.totalorder %s34, 0
      %p365 = por %p363, %p364
      %s367 = sadd.s32 %s366, 1
      %p370 = scmp.eq.s32.totalorder %s28, 1
      %p371 = scmp.ne.s32.totalorder %s366, %s368
      %p372 = scmp.eq.s32.totalorder %s28, 0
      %p373 = por %p371, %p372
      %p374 = scmp.ne.s32.totalorder %s366, %s368
      %p375 = scmp.eq.s32.totalorder %s33, 1
      %p376 = por %p374, %p375
      %p377 = scmp.ne.s32.totalorder %s368, %s369
      %p378 = scmp.eq.s32.totalorder %s33, 0
      %p379 = por %p377, %p378
      %p380 = scmp.ne.s32.totalorder %s368, %s369
      %p381 = scmp.eq.s32.totalorder %s34, 1
      %p382 = por %p380, %p381
      %p384 = scmp.ne.s32.totalorder %s369, %s383
      %p385 = scmp.eq.s32.totalorder %s34, 0
      %p386 = por %p384, %p385
      %s387 = ssub.s32 %s28, %s35
      %p388 = scmp.eq.s32.totalorder %s387, 0
      %s390 = sadd.s32 %s389, 1
      %s391 = scalar_select %p388, %s389, %s390
      %p394 = pneg %p388
      %p395 = scmp.eq.s32.totalorder %s28, 1
      %p396 = por %p394, %p395
      %p397 = scmp.ne.s32.totalorder %s389, %s392
      %p398 = scmp.eq.s32.totalorder %s28, 0
      %p399 = por %p397, %p398
      %p400 = scmp.ne.s32.totalorder %s389, %s392
      %p401 = scmp.eq.s32.totalorder %s33, 1
      %p402 = por %p400, %p401
      %p403 = scmp.ne.s32.totalorder %s392, %s393
      %p404 = scmp.eq.s32.totalorder %s33, 0
      %p405 = por %p403, %p404
      %p406 = scmp.ne.s32.totalorder %s392, %s393
      %p407 = scmp.eq.s32.totalorder %s34, 1
      %p408 = por %p406, %p407
      %p410 = scmp.ne.s32.totalorder %s393, %s409
      %p411 = scmp.eq.s32.totalorder %s34, 0
      %p412 = por %p410, %p411
      %p413 = scmp.le.s32.totalorder 1, %s28
      %p414 = scmp.lt.s32.totalorder %s28, 3
      %p415 = pnand %p413, %p414
      %p416 = pneg %p415
      // Predicated region
      $region9: #{tpu_custom_call.1} parent=5 // pred_check
        _
      $region10: #{tpu_custom_call.1} parent=5 // pred_check_branch
        %418 = sbr.rel (%p415) target = $region12
      $region11: #{tpu_custom_call.1} parent=5 // pred_region
        %s419 = ssub.s32 %s28, 1
        // Predicated region
        $region13: #{tpu_custom_call.1} parent=11 // pred_check
          %p420 = pneg %p127
        $region14: #{tpu_custom_call.1} parent=11 // pred_check_branch
          %422 = sbr.rel (%p420) target = $region16
        $region15: #{tpu_custom_call.1} parent=11 // pred_region
          _
        $region16: #{tpu_custom_call.1} parent=11 // pred_fallthru
          _
        // Predicated region
        $region17: #{tpu_custom_call.1} parent=11 // pred_check
          %p423 = pneg %p148
        $region18: #{tpu_custom_call.1} parent=11 // pred_check_branch
          %425 = sbr.rel (%p423) target = $region20
        $region19: #{tpu_custom_call.1} parent=11 // pred_region
          %s427 = ssub.s32 32, 32
          %428 = vsyncadd [#allocation3], %s427
          %s430 = sshll.u32 [#allocation2], 4
          %s431 = int_to_ptr.vmem [resolvable:$true] %s430
          %433 = dma.hbm_to_vmem [thread:$0]  %s4, 32, %s431, [#allocation3]
        $region20: #{tpu_custom_call.1} parent=11 // pred_fallthru
          _
        // Predicated region
        $region21: #{tpu_custom_call.1} parent=11 // pred_check
          %p434 = pneg %p169
        $region22: #{tpu_custom_call.1} parent=11 // pred_check_branch
          %436 = sbr.rel (%p434) target = $region24
        $region23: #{tpu_custom_call.1} parent=11 // pred_region
          %s438 = ssub.s32 16, 16
          %439 = vsyncadd [#allocation6], %s438
          %s441 = sshll.u32 [#allocation5], 4
          %s442 = int_to_ptr.vmem [resolvable:$true] %s441
          %444 = dma.hbm_to_vmem [thread:$0]  %s5, 16, %s442, [#allocation6]
        $region24: #{tpu_custom_call.1} parent=11 // pred_fallthru
          _
        // Predicated region
        $region25: #{tpu_custom_call.1} parent=11 // pred_check
          %p445 = pneg %p190
        $region26: #{tpu_custom_call.1} parent=11 // pred_check_branch
          %447 = sbr.rel (%p445) target = $region28
        $region27: #{tpu_custom_call.1} parent=11 // pred_region
          _
        $region28: #{tpu_custom_call.1} parent=11 // pred_fallthru
          _
        // Predicated region
        $region29: #{tpu_custom_call.1} parent=11 // pred_check
          %p448 = pneg %p211
        $region30: #{tpu_custom_call.1} parent=11 // pred_check_branch
          %450 = sbr.rel (%p448) target = $region32
        $region31: #{tpu_custom_call.1} parent=11 // pred_region
          %s452 = ssub.s32 16, 16
          %453 = vsyncadd [#allocation6], %s452
          %s455 = sshll.u32 [#allocation7], 4
          %s456 = int_to_ptr.vmem [resolvable:$true] %s455
          %458 = dma.hbm_to_vmem [thread:$0]  %s7, 16, %s456, [#allocation6]
        $region32: #{tpu_custom_call.1} parent=11 // pred_fallthru
          _
        // Predicated region
        $region33: #{tpu_custom_call.1} parent=11 // pred_check
          %p459 = pneg %p232
        $region34: #{tpu_custom_call.1} parent=11 // pred_check_branch
          %461 = sbr.rel (%p459) target = $region36
        $region35: #{tpu_custom_call.1} parent=11 // pred_region
          _
        $region36: #{tpu_custom_call.1} parent=11 // pred_fallthru
          _
        // Predicated region
        $region37: #{tpu_custom_call.1} parent=11 // pred_check
          %p462 = pneg %p253
        $region38: #{tpu_custom_call.1} parent=11 // pred_check_branch
          %464 = sbr.rel (%p462) target = $region40
        $region39: #{tpu_custom_call.1} parent=11 // pred_region
          _
        $region40: #{tpu_custom_call.1} parent=11 // pred_fallthru
          _
        // Predicated region
        $region41: #{tpu_custom_call.1} parent=11 // pred_check
          %p465 = pneg %p274
        $region42: #{tpu_custom_call.1} parent=11 // pred_check_branch
          %467 = sbr.rel (%p465) target = $region44
        $region43: #{tpu_custom_call.1} parent=11 // pred_region
          %s469 = ssub.s32 1024, 1024
          %470 = vsyncadd [#allocation9], %s469
          %s471 = sshll.u32 [#allocation8], 4
          %s472 = int_to_ptr.vmem [resolvable:$true] %s471
          %477 = dma.hbm_to_vmem [thread:$0]  %s10, 1024, %s472, [#allocation9], 64, 64, 4
        $region44: #{tpu_custom_call.1} parent=11 // pred_fallthru
          _
        // Predicated region
        $region45: #{tpu_custom_call.1} parent=11 // pred_check
          %p478 = pneg %p295
        $region46: #{tpu_custom_call.1} parent=11 // pred_check_branch
          %480 = sbr.rel (%p478) target = $region48
        $region47: #{tpu_custom_call.1} parent=11 // pred_region
          _
        $region48: #{tpu_custom_call.1} parent=11 // pred_fallthru
          _
        // Predicated region
        $region49: #{tpu_custom_call.1} parent=11 // pred_check
          %p481 = pneg %p316
        $region50: #{tpu_custom_call.1} parent=11 // pred_check_branch
          %483 = sbr.rel (%p481) target = $region52
        $region51: #{tpu_custom_call.1} parent=11 // pred_region
          _
        $region52: #{tpu_custom_call.1} parent=11 // pred_fallthru
          _
        // Predicated region
        $region53: #{tpu_custom_call.1} parent=11 // pred_check
          %p484 = pneg %p337
        $region54: #{tpu_custom_call.1} parent=11 // pred_check_branch
          %486 = sbr.rel (%p484) target = $region56
        $region55: #{tpu_custom_call.1} parent=11 // pred_region
          _
        $region56: #{tpu_custom_call.1} parent=11 // pred_fallthru
          _
        // Predicated region
        $region57: #{tpu_custom_call.1} parent=11 // pred_check
          %p487 = pneg %p358
        $region58: #{tpu_custom_call.1} parent=11 // pred_check_branch
          %489 = sbr.rel (%p487) target = $region60
        $region59: #{tpu_custom_call.1} parent=11 // pred_region
          %s491 = ssub.s32 1024, 1024
          %492 = vsyncadd [#allocation9], %s491
          %s493 = sshll.u32 [#allocation10], 4
          %s494 = int_to_ptr.vmem [resolvable:$true] %s493
          %499 = dma.hbm_to_vmem [thread:$0]  %s14, 1024, %s494, [#allocation9], 64, 64, 4
        $region60: #{tpu_custom_call.1} parent=11 // pred_fallthru
          _
        // Predicated region
        $region61: #{tpu_custom_call.1} parent=11 // pred_check
          %p500 = pneg %p379
        $region62: #{tpu_custom_call.1} parent=11 // pred_check_branch
          %502 = sbr.rel (%p500) target = $region64
        $region63: #{tpu_custom_call.1} parent=11 // pred_region
          _
        $region64: #{tpu_custom_call.1} parent=11 // pred_fallthru
          _
      $region12: #{tpu_custom_call.1} parent=5 // pred_fallthru
        _
      %p503 = scmp.lt.s32.totalorder %s28, 2
      // Predicated region
      $region65: #{tpu_custom_call.1} parent=5 // pred_check
        %p504 = pneg %p503
      $region66: #{tpu_custom_call.1} parent=5 // pred_check_branch
        %506 = sbr.rel (%p504) target = $region68
      $region67: #{tpu_custom_call.1} parent=5 // pred_region
        // Predicated region
        $region69: #{tpu_custom_call.1} parent=67 // pred_check
          %p507 = pneg %p48
        $region70: #{tpu_custom_call.1} parent=67 // pred_check_branch
          %509 = sbr.rel (%p507) target = $region72
        $region71: #{tpu_custom_call.1} parent=67 // pred_region
          %p510 = scmp.lt.s32.totalorder %s28, 1
          %s511 = scalar_select %p510, %s28, 1
          %s512 = smul.addr %s511, 8
          %s513 = scalar_lea.vmem %s0, %s512
        $region72: #{tpu_custom_call.1} parent=67 // pred_fallthru
          _
        // Predicated region
        $region73: #{tpu_custom_call.1} parent=67 // pred_check
          %p514 = pneg %p74
        $region74: #{tpu_custom_call.1} parent=67 // pred_check_branch
          %516 = sbr.rel (%p514) target = $region76
        $region75: #{tpu_custom_call.1} parent=67 // pred_region
          %p517 = scmp.lt.s32.totalorder %s28, 1
          %s518 = scalar_select %p517, %s28, 1
          %s519 = smul.addr %s518, 8
          %s520 = scalar_lea.vmem %s1, %s519
        $region76: #{tpu_custom_call.1} parent=67 // pred_fallthru
          _
        // Predicated region
        $region77: #{tpu_custom_call.1} parent=67 // pred_check
          %p521 = pneg %p100
        $region78: #{tpu_custom_call.1} parent=67 // pred_check_branch
          %523 = sbr.rel (%p521) target = $region80
        $region79: #{tpu_custom_call.1} parent=67 // pred_region
          %p524 = scmp.lt.s32.totalorder %s28, 1
          %s525 = scalar_select %p524, %s28, 1
          %s526 = smul.addr %s525, 8
          %s527 = scalar_lea.vmem %s2, %s526
        $region80: #{tpu_custom_call.1} parent=67 // pred_fallthru
          _
      $region68: #{tpu_custom_call.1} parent=5 // pred_fallthru
        _
      %p528 = scmp.le.s32.totalorder 1, %s28
      %p529 = scmp.lt.s32.totalorder %s28, 3
      %p530 = pnand %p528, %p529
      %p531 = pneg %p530
      // Predicated region
      $region81: #{tpu_custom_call.1} parent=5 // pred_check
        _
      $region82: #{tpu_custom_call.1} parent=5 // pred_check_branch
        %533 = sbr.rel (%p530) target = $region84
      $region83: #{tpu_custom_call.1} parent=5 // pred_region
        %s534 = ssub.s32 %s28, 1
        // Predicated region
        $region85: #{tpu_custom_call.1} parent=83 // pred_check
          %p535 = pneg %p148
        $region86: #{tpu_custom_call.1} parent=83 // pred_check_branch
          %537 = sbr.rel (%p535) target = $region88
        $region87: #{tpu_custom_call.1} parent=83 // pred_region
          %538 = dma.done [#allocation3], 32
        $region88: #{tpu_custom_call.1} parent=83 // pred_fallthru
          _
        // Predicated region
        $region89: #{tpu_custom_call.1} parent=83 // pred_check
          %p539 = pneg %p169
        $region90: #{tpu_custom_call.1} parent=83 // pred_check_branch
          %541 = sbr.rel (%p539) target = $region92
        $region91: #{tpu_custom_call.1} parent=83 // pred_region
          %542 = dma.done [#allocation6], 16
        $region92: #{tpu_custom_call.1} parent=83 // pred_fallthru
          _
        // Predicated region
        $region93: #{tpu_custom_call.1} parent=83 // pred_check
          %p543 = pneg %p211
        $region94: #{tpu_custom_call.1} parent=83 // pred_check_branch
          %545 = sbr.rel (%p543) target = $region96
        $region95: #{tpu_custom_call.1} parent=83 // pred_region
          %546 = dma.done [#allocation6], 16
        $region96: #{tpu_custom_call.1} parent=83 // pred_fallthru
          _
        // Predicated region
        $region97: #{tpu_custom_call.1} parent=83 // pred_check
          %p547 = pneg %p274
        $region98: #{tpu_custom_call.1} parent=83 // pred_check_branch
          %549 = sbr.rel (%p547) target = $region100
        $region99: #{tpu_custom_call.1} parent=83 // pred_region
          %550 = dma.done [#allocation9], 1024
        $region100: #{tpu_custom_call.1} parent=83 // pred_fallthru
          _
        // Predicated region
        $region101: #{tpu_custom_call.1} parent=83 // pred_check
          %p551 = pneg %p358
        $region102: #{tpu_custom_call.1} parent=83 // pred_check_branch
          %553 = sbr.rel (%p551) target = $region104
        $region103: #{tpu_custom_call.1} parent=83 // pred_region
          %554 = dma.done [#allocation9], 1024
        $region104: #{tpu_custom_call.1} parent=83 // pred_fallthru
          _
        %p555 = scmp.lt.s32.totalorder %s33, 1
        %s556 = scalar_select %p555, %s33, 1
        %s557 = smul.addr %s556, 8
        %s558 = scalar_lea.vmem %s0, %s557
        %p559 = pneg %p54
        %p560 = pneg %p51
        %p561 = scmp.lt.s32.totalorder %s33, 1
        %s562 = scalar_select %p561, %s33, 1
        %s563 = smul.addr %s562, 8
        %s564 = scalar_lea.vmem %s1, %s563
        %p565 = pneg %p80
        %p566 = pneg %p77
        %p567 = scmp.lt.s32.totalorder %s33, 1
        %s568 = scalar_select %p567, %s33, 1
        %s569 = smul.addr %s568, 8
        %s570 = scalar_lea.vmem %s2, %s569
        %p571 = pneg %p106
        %p572 = pneg %p103
        %p573 = pneg %p127
        %p574 = pneg %p124
        %p575 = pneg %p148
        %p576 = pneg %p145
        %p577 = pneg %p169
        %p578 = pneg %p166
        %p579 = pneg %p190
        %p580 = pneg %p187
        %p581 = pneg %p211
        %p582 = pneg %p208
        %p583 = pneg %p232
        %p584 = pneg %p229
        %p585 = pneg %p253
        %p586 = pneg %p250
        %p587 = pneg %p274
        %p588 = pneg %p271
        %p589 = pneg %p295
        %p590 = pneg %p292
        %p591 = pneg %p316
        %p592 = pneg %p313
        %p593 = pneg %p337
        %p594 = pneg %p334
        %p595 = pneg %p358
        %p596 = pneg %p355
        %p597 = pneg %p379
        %p598 = pneg %p376
        %p599 = pneg %p405
        %p600 = pneg %p402
        %s601 = sand.u32 %s392, 1
        %s602 = scalar_lea.sflag [#allocation4], %s601
        %s603 = sand.u32 %s392, 1
        %s604 = smul.addr %s603, 8
        %s605 = scalar_lea.vmem [#allocation11], %s604
        %p606 = scmp.lt.s32.totalorder %s33, 1
        %s607 = scalar_select %p606, %s33, 1
        %s608 = smul.addr %s607, 8
        %s609 = scalar_lea.vmem %s0, %s608
        %p610 = scmp.lt.s32.totalorder %s33, 1
        %s611 = scalar_select %p610, %s33, 1
        %s612 = smul.addr %s611, 8
        %s613 = scalar_lea.vmem %s1, %s612
        %p614 = scmp.lt.s32.totalorder %s33, 1
        %s615 = scalar_select %p614, %s33, 1
        %s616 = smul.addr %s615, 8
        %s617 = scalar_lea.vmem %s2, %s616
        %v619 = vld [vmem:[%s609] sm:$0xff]
        %v620 = vld [vmem:[%s613] sm:$0xff]
        %v621 = vld [vmem:[%s617] sm:$0xff]
        %v622 = vld [vmem:[%s3] sm:$0x7]
        %v623 = vld [vmem:[#allocation2] sm:$0x3]
        %vm624 = vcmask 15360
        %v626 = vsel %vm624, %v620, 0
        %vm628 = vcmask 1041408
        %v630 = vsel %vm628, %v623, 0
        %632 = vmatprep.subr.mxu0 0.0
        %633 = vmatpush1.msra.mxu0 0.0
        %634 = vmatprep.subr.mxu0 0.0
        %635 = vmatpush1.msra.mxu0 0.0
        %636 = vmatprep.subr.mxu0 0.0
        %637 = vmatpush1.msra.mxu0 0.0
        %638 = vmatprep.subr.mxu0 0.0
        %639 = vmatpush1.msra.mxu0 0.0
        %640 = vmatprep.subr.mxu0 0.0
        %641 = vmatpush1.msra.mxu0 0.0
        %642 = vmatprep.subr.mxu0 0.0
        %643 = vmatpush1.msra.mxu0 0.0
        %644 = vmatprep.subr.mxu0 0.0
        %645 = vmatpush1.msra.mxu0 0.0
        %646 = vmatprep.subr.mxu0 0.0
        %647 = vmatpush1.msra.mxu0 0.0
        %648 = vmatprep.subr.mxu0 0.0
        %649 = vmatpush1.msra.mxu0 0.0
        %650 = vmatprep.subr.mxu0 0.0
        %651 = vmatpush1.msra.mxu0 0.0
        %652 = vmatprep.subr.mxu0 0.0
        %653 = vmatpush1.msra.mxu0 0.0
        %654 = vmatprep.subr.mxu0 0.0
        %655 = vmatpush1.msra.mxu0 0.0
        %656 = vmatprep.subr.mxu0 0.0
        %657 = vmatpush1.msra.mxu0 0.0
        %658 = vmatprep.subr.mxu0 0.0
        %659 = vmatpush1.msra.mxu0 0.0
        %660 = vmatprep.subr.mxu0 0.0
        %661 = vmatpush1.msra.mxu0 0.0
        %662 = vmatprep.subr.mxu0 0.0
        %663 = vmatpush1.msra.mxu0 %v630
        %664 = vmatprep.subr.mxu0 0.0
        %665 = vmatpush2.msra.mxu0 0.0
        %666 = vmatprep.subr.mxu0 0.0
        %667 = vmatpush2.msra.mxu0 0.0
        %668 = vmatprep.subr.mxu0 0.0
        %669 = vmatpush2.msra.mxu0 0.0
        %670 = vmatprep.subr.mxu0 0.0
        %671 = vmatpush2.msra.mxu0 0.0
        %672 = vmatprep.subr.mxu0 0.0
        %673 = vmatpush2.msra.mxu0 0.0
        %674 = vmatprep.subr.mxu0 0.0
        %675 = vmatpush2.msra.mxu0 0.0
        %676 = vmatprep.subr.mxu0 0.0
        %677 = vmatpush2.msra.mxu0 0.0
        %678 = vmatprep.subr.mxu0 0.0
        %679 = vmatpush2.msra.mxu0 0.0
        %680 = vmatprep.subr.mxu0 0.0
        %681 = vmatpush2.msra.mxu0 0.0
        %682 = vmatprep.subr.mxu0 0.0
        %683 = vmatpush2.msra.mxu0 0.0
        %684 = vmatprep.subr.mxu0 0.0
        %685 = vmatpush2.msra.mxu0 0.0
        %686 = vmatprep.subr.mxu0 0.0
        %687 = vmatpush2.msra.mxu0 0.0
        %688 = vmatprep.subr.mxu0 0.0
        %689 = vmatpush2.msra.mxu0 0.0
        %690 = vmatprep.subr.mxu0 0.0
        %691 = vmatpush2.msra.mxu0 0.0
        %692 = vmatprep.subr.mxu0 0.0
        %693 = vmatpush2.msra.mxu0 0.0
        %694 = vmatprep.subr.mxu0 0.0
        %695 = vmatpush2.msra.mxu0 0.0
        %696 = vmatprep.mubr.f32.mxu0 0.0
        %697 = vmatmul.mubr.f32.gmra.mxu0 %v626
        %v698 = vpop.f32.mrf.mxu0
        %v699 = vadd.f32 0.0, %v698
        %v700 = vpop.f32.mrf.mxu0
        %701 = vdwg.mxu0
        %vm702 = vcmask 23552
        %v704 = vsel %vm702, %v619, 0
        %vm706 = vcmask 1042432
        %v708 = vsel %vm706, %v622, 0
        %710 = vmatprep.subr.mxu0 0.0
        %711 = vmatpush1.msra.mxu0 0.0
        %712 = vmatprep.subr.mxu0 0.0
        %713 = vmatpush1.msra.mxu0 0.0
        %714 = vmatprep.subr.mxu0 0.0
        %715 = vmatpush1.msra.mxu0 0.0
        %716 = vmatprep.subr.mxu0 0.0
        %717 = vmatpush1.msra.mxu0 0.0
        %718 = vmatprep.subr.mxu0 0.0
        %719 = vmatpush1.msra.mxu0 0.0
        %720 = vmatprep.subr.mxu0 0.0
        %721 = vmatpush1.msra.mxu0 0.0
        %722 = vmatprep.subr.mxu0 0.0
        %723 = vmatpush1.msra.mxu0 0.0
        %724 = vmatprep.subr.mxu0 0.0
        %725 = vmatpush1.msra.mxu0 0.0
        %726 = vmatprep.subr.mxu0 0.0
        %727 = vmatpush1.msra.mxu0 0.0
        %728 = vmatprep.subr.mxu0 0.0
        %729 = vmatpush1.msra.mxu0 0.0
        %730 = vmatprep.subr.mxu0 0.0
        %731 = vmatpush1.msra.mxu0 0.0
        %732 = vmatprep.subr.mxu0 0.0
        %733 = vmatpush1.msra.mxu0 0.0
        %734 = vmatprep.subr.mxu0 0.0
        %735 = vmatpush1.msra.mxu0 0.0
        %736 = vmatprep.subr.mxu0 0.0
        %737 = vmatpush1.msra.mxu0 0.0
        %738 = vmatprep.subr.mxu0 0.0
        %739 = vmatpush1.msra.mxu0 0.0
        %740 = vmatprep.subr.mxu0 0.0
        %741 = vmatpush1.msra.mxu0 %v708
        %742 = vmatprep.subr.mxu0 0.0
        %743 = vmatpush2.msra.mxu0 0.0
        %744 = vmatprep.subr.mxu0 0.0
        %745 = vmatpush2.msra.mxu0 0.0
        %746 = vmatprep.subr.mxu0 0.0
        %747 = vmatpush2.msra.mxu0 0.0
        %748 = vmatprep.subr.mxu0 0.0
        %749 = vmatpush2.msra.mxu0 0.0
        %750 = vmatprep.subr.mxu0 0.0
        %751 = vmatpush2.msra.mxu0 0.0
        %752 = vmatprep.subr.mxu0 0.0
        %753 = vmatpush2.msra.mxu0 0.0
        %754 = vmatprep.subr.mxu0 0.0
        %755 = vmatpush2.msra.mxu0 0.0
        %756 = vmatprep.subr.mxu0 0.0
        %757 = vmatpush2.msra.mxu0 0.0
        %758 = vmatprep.subr.mxu0 0.0
        %759 = vmatpush2.msra.mxu0 0.0
        %760 = vmatprep.subr.mxu0 0.0
        %761 = vmatpush2.msra.mxu0 0.0
        %762 = vmatprep.subr.mxu0 0.0
        %763 = vmatpush2.msra.mxu0 0.0
        %764 = vmatprep.subr.mxu0 0.0
        %765 = vmatpush2.msra.mxu0 0.0
        %766 = vmatprep.subr.mxu0 0.0
        %767 = vmatpush2.msra.mxu0 0.0
        %768 = vmatprep.subr.mxu0 0.0
        %769 = vmatpush2.msra.mxu0 0.0
        %770 = vmatprep.subr.mxu0 0.0
        %771 = vmatpush2.msra.mxu0 0.0
        %772 = vmatprep.subr.mxu0 0.0
        %773 = vmatpush2.msra.mxu0 0.0
        %774 = vmatprep.mubr.f32.mxu0 0.0
        %775 = vmatmul.mubr.f32.gmra.mxu0 %v704
        %v776 = vpop.f32.mrf.mxu0
        %v777 = vadd.f32 %v699, %v776
        %v778 = vpop.f32.mrf.mxu0
        %779 = vdwg.mxu0
        %v780 = vld [vmem:[#allocation5] sm:$0x1]
        %v782 = vlaneseq
        %v783 = vshrl.u32 %v782, 7
        %v784 = vsub.s32 0, %v783
        %v785 = vrot.slane %v780, %v784
        %v787 = vadd.f32 %v777, %v785
        %v788 = vmax.f32 %v787, 0.0
        %v789 = vld [vmem:[%s6] sm:$0xf]
        %v790 = vld [vmem:[%s6 + $0x4] sm:$0xf]
        %v791 = vld [vmem:[%s6 + $0x8] sm:$0xf]
        %v792 = vld [vmem:[%s6 + $0xc] sm:$0xf]
        %v793 = vld [vmem:[%s6 + $0x10] sm:$0xf]
        %v794 = vld [vmem:[%s6 + $0x14] sm:$0xf]
        %v795 = vld [vmem:[%s6 + $0x18] sm:$0xf]
        %v796 = vld [vmem:[%s6 + $0x1c] sm:$0xf]
        %v797 = vld [vmem:[%s6 + $0x20] sm:$0xf]
        %v798 = vld [vmem:[%s6 + $0x24] sm:$0xf]
        %v799 = vld [vmem:[%s6 + $0x28] sm:$0xf]
        %v800 = vld [vmem:[%s6 + $0x2c] sm:$0xf]
        %v801 = vld [vmem:[%s6 + $0x30] sm:$0xf]
        %v802 = vld [vmem:[%s6 + $0x34] sm:$0xf]
        %v803 = vld [vmem:[%s6 + $0x38] sm:$0xf]
        %v804 = vld [vmem:[%s6 + $0x3c] sm:$0xf]
        %v805 = vld [vmem:[#allocation7] sm:$0x1]
        %v806 = vpack.c.bf16 %v788, %v788
        %v808 = vlaneseq
        %v809 = vshrl.u32 %v808, 7
        %v810 = vsub.s32 0, %v809
        %v811 = vrot.slane %v805, %v810
        %v829 = vunpack.c.l.b16 %v789
        %v830 = vunpack.c.l.b16 %v790
        %v831 = vunpack.c.l.b16 %v791
        %v832 = vunpack.c.l.b16 %v792
        %v833 = vunpack.c.l.b16 %v793
        %v834 = vunpack.c.l.b16 %v794
        %v835 = vunpack.c.l.b16 %v795
        %v836 = vunpack.c.l.b16 %v796
        %v837 = vunpack.c.l.b16 %v797
        %v838 = vunpack.c.l.b16 %v798
        %v839 = vunpack.c.l.b16 %v799
        %v840 = vunpack.c.l.b16 %v800
        %v841 = vunpack.c.l.b16 %v801
        %v842 = vunpack.c.l.b16 %v802
        %v843 = vunpack.c.l.b16 %v803
        %v844 = vunpack.c.l.b16 %v804
        %v845 = vpack.c.b16 %v830, %v829
        %v846 = vpack.c.b16 %v832, %v831
        %v847 = vpack.c.b16 %v834, %v833
        %v848 = vpack.c.b16 %v836, %v835
        %v849 = vpack.c.b16 %v838, %v837
        %v850 = vpack.c.b16 %v840, %v839
        %v851 = vpack.c.b16 %v842, %v841
        %v852 = vpack.c.b16 %v844, %v843
        %861 = vmatprep.subr.bf16.mxu0 0
        %862 = vmatpush1.bf16.msra.mxu0 %v852
        %863 = vmatprep.subr.bf16.mxu0 0
        %864 = vmatpush1.bf16.msra.mxu0 %v851
        %865 = vmatprep.subr.bf16.mxu0 0
        %866 = vmatpush1.bf16.msra.mxu0 %v850
        %867 = vmatprep.subr.bf16.mxu0 0
        %868 = vmatpush1.bf16.msra.mxu0 %v849
        %869 = vmatprep.subr.bf16.mxu0 0
        %870 = vmatpush1.bf16.msra.mxu0 %v848
        %871 = vmatprep.subr.bf16.mxu0 0
        %872 = vmatpush1.bf16.msra.mxu0 %v847
        %873 = vmatprep.subr.bf16.mxu0 0
        %874 = vmatpush1.bf16.msra.mxu0 %v846
        %875 = vmatprep.subr.bf16.mxu0 0
        %876 = vmatpush1.bf16.msra.mxu0 %v845
        %877 = vmatprep.subr.bf16.mxu0 0
        %878 = vmatpush2.bf16.msra.mxu0 0
        %879 = vmatprep.subr.bf16.mxu0 0
        %880 = vmatpush2.bf16.msra.mxu0 0
        %881 = vmatprep.subr.bf16.mxu0 0
        %882 = vmatpush2.bf16.msra.mxu0 0
        %883 = vmatprep.subr.bf16.mxu0 0
        %884 = vmatpush2.bf16.msra.mxu0 0
        %885 = vmatprep.subr.bf16.mxu0 0
        %886 = vmatpush2.bf16.msra.mxu0 0
        %887 = vmatprep.subr.bf16.mxu0 0
        %888 = vmatpush2.bf16.msra.mxu0 0
        %889 = vmatprep.subr.bf16.mxu0 0
        %890 = vmatpush2.bf16.msra.mxu0 0
        %891 = vmatprep.subr.bf16.mxu0 0
        %892 = vmatpush2.bf16.msra.mxu0 0
        %893 = vmatprep.mubr.bf16.mxu0 0
        %894 = vmatmul.mubr.bf16.gmra.mxu0 %v806
        %v895 = vpop.f32.mrf.mxu0
        %v896 = vadd.f32 %v811, %v895
        %v897 = vpop.f32.mrf.mxu0
        %v898 = vpop.f32.mrf.mxu0
        %v899 = vpop.f32.mrf.mxu0
        %900 = vdwg.mxu0
        %v901 = vmul.f32 %v896, 0.17677669
        %v902 = vpack.c.bf16 %v901, %v901
        %v903 = vpack.c.bf16 %v896, %v896
        %904 = vmatprep.subr.bf16.mxu0 0
        %905 = vmatpush1.bf16.xpose.msra.mxu0 0
        %906 = vmatprep.subr.bf16.mxu0 0
        %907 = vmatpush1.bf16.xpose.msra.mxu0 0
        %908 = vmatprep.subr.bf16.mxu0 0
        %909 = vmatpush1.bf16.xpose.msra.mxu0 0
        %910 = vmatprep.subr.bf16.mxu0 0
        %911 = vmatpush1.bf16.xpose.msra.mxu0 0
        %912 = vmatprep.subr.bf16.mxu0 0
        %913 = vmatpush1.bf16.xpose.msra.mxu0 0
        %914 = vmatprep.subr.bf16.mxu0 0
        %915 = vmatpush1.bf16.xpose.msra.mxu0 0
        %916 = vmatprep.subr.bf16.mxu0 0
        %917 = vmatpush1.bf16.xpose.msra.mxu0 0
        %918 = vmatprep.subr.bf16.mxu0 0
        %919 = vmatpush1.bf16.xpose.msra.mxu0 %v903
        %920 = vmatprep.subr.bf16.mxu0 0
        %921 = vmatpush2.bf16.xpose.msra.mxu0 0
        %922 = vmatprep.subr.bf16.mxu0 0
        %923 = vmatpush2.bf16.xpose.msra.mxu0 0
        %924 = vmatprep.subr.bf16.mxu0 0
        %925 = vmatpush2.bf16.xpose.msra.mxu0 0
        %926 = vmatprep.subr.bf16.mxu0 0
        %927 = vmatpush2.bf16.xpose.msra.mxu0 0
        %928 = vmatprep.subr.bf16.mxu0 0
        %929 = vmatpush2.bf16.xpose.msra.mxu0 0
        %930 = vmatprep.subr.bf16.mxu0 0
        %931 = vmatpush2.bf16.xpose.msra.mxu0 0
        %932 = vmatprep.subr.bf16.mxu0 0
        %933 = vmatpush2.bf16.xpose.msra.mxu0 0
        %934 = vmatprep.subr.bf16.mxu0 0
        %935 = vmatpush2.bf16.xpose.msra.mxu0 0
        %936 = vmatprep.mubr.bf16.mxu0 0
        %937 = vmatmul.mubr.bf16.gmra.mxu0 %v902
        %v938 = vpop.f32.mrf.mxu0
        %v939 = vadd.f32 0.0, %v938
        %v940 = vpop.f32.mrf.mxu0
        %v941 = vpop.f32.mrf.mxu0
        %v942 = vpop.f32.mrf.mxu0
        %943 = vdwg.mxu0
        %vm944 = vcmask 64512
        %v945 = vsel %vm944, %v939, -inf
        %946 = vmax.xlane.f32.xlu0 %v945
        %v947 = vpop.xlane.xlu0 %946
        %v948 = vsub.f32 %v939, %v947
        %v949 = vmul.f32 %v948, 1.442695
        %v950 = vpow.pop %v949
        %v951 = vsel %vm944, %v950, 0.0
        %952 = vadd.xlane.f32.xlu0 %v951
        %v953 = vpop.xlane.xlu0 %952
        %v954 = vrcp.pop %v953
        %v955 = vmul.f32 1.0, %v954
        %v956 = vmul.f32 %v950, %v955
        %v957 = vpack.c.bf16 %v956, %v956
        %v959 = vsel %vm944, %v957, 0
        %vm961 = vcmask 1043456
        %v963 = vsel %vm961, %v903, 0
        %965 = vmatprep.subr.bf16.mxu0 0
        %966 = vmatpush1.bf16.msra.mxu0 0
        %967 = vmatprep.subr.bf16.mxu0 0
        %968 = vmatpush1.bf16.msra.mxu0 0
        %969 = vmatprep.subr.bf16.mxu0 0
        %970 = vmatpush1.bf16.msra.mxu0 0
        %971 = vmatprep.subr.bf16.mxu0 0
        %972 = vmatpush1.bf16.msra.mxu0 0
        %973 = vmatprep.subr.bf16.mxu0 0
        %974 = vmatpush1.bf16.msra.mxu0 0
        %975 = vmatprep.subr.bf16.mxu0 0
        %976 = vmatpush1.bf16.msra.mxu0 0
        %977 = vmatprep.subr.bf16.mxu0 0
        %978 = vmatpush1.bf16.msra.mxu0 0
        %979 = vmatprep.subr.bf16.mxu0 0
        %980 = vmatpush1.bf16.msra.mxu0 %v963
        %981 = vmatprep.subr.bf16.mxu0 0
        %982 = vmatpush2.bf16.msra.mxu0 0
        %983 = vmatprep.subr.bf16.mxu0 0
        %984 = vmatpush2.bf16.msra.mxu0 0
        %985 = vmatprep.subr.bf16.mxu0 0
        %986 = vmatpush2.bf16.msra.mxu0 0
        %987 = vmatprep.subr.bf16.mxu0 0
        %988 = vmatpush2.bf16.msra.mxu0 0
        %989 = vmatprep.subr.bf16.mxu0 0
        %990 = vmatpush2.bf16.msra.mxu0 0
        %991 = vmatprep.subr.bf16.mxu0 0
        %992 = vmatpush2.bf16.msra.mxu0 0
        %993 = vmatprep.subr.bf16.mxu0 0
        %994 = vmatpush2.bf16.msra.mxu0 0
        %995 = vmatprep.subr.bf16.mxu0 0
        %996 = vmatpush2.bf16.msra.mxu0 0
        %997 = vmatprep.mubr.bf16.mxu0 0
        %998 = vmatmul.mubr.bf16.gmra.mxu0 %v959
        %v999 = vpop.f32.mrf.mxu0
        %v1000 = vadd.f32 0.0, %v999
        %v1001 = vpop.f32.mrf.mxu0
        %v1002 = vpop.f32.mrf.mxu0
        %v1003 = vpop.f32.mrf.mxu0
        %1004 = vdwg.mxu0
        %v1005 = vld [vmem:[%s8] sm:$0x7]
        %v1006 = vld [vmem:[%s9] sm:$0x1]
        %v1008 = vlaneseq
        %v1009 = vshrl.u32 %v1008, 7
        %v1010 = vsub.s32 0, %v1009
        %v1011 = vrot.slane %v1006, %v1010
        %v1014 = vsel %vm706, %v1005, 0
        %1016 = vmatprep.subr.mxu0 0.0
        %1017 = vmatpush1.msra.mxu0 0.0
        %1018 = vmatprep.subr.mxu0 0.0
        %1019 = vmatpush1.msra.mxu0 0.0
        %1020 = vmatprep.subr.mxu0 0.0
        %1021 = vmatpush1.msra.mxu0 0.0
        %1022 = vmatprep.subr.mxu0 0.0
        %1023 = vmatpush1.msra.mxu0 0.0
        %1024 = vmatprep.subr.mxu0 0.0
        %1025 = vmatpush1.msra.mxu0 0.0
        %1026 = vmatprep.subr.mxu0 0.0
        %1027 = vmatpush1.msra.mxu0 0.0
        %1028 = vmatprep.subr.mxu0 0.0
        %1029 = vmatpush1.msra.mxu0 0.0
        %1030 = vmatprep.subr.mxu0 0.0
        %1031 = vmatpush1.msra.mxu0 0.0
        %1032 = vmatprep.subr.mxu0 0.0
        %1033 = vmatpush1.msra.mxu0 0.0
        %1034 = vmatprep.subr.mxu0 0.0
        %1035 = vmatpush1.msra.mxu0 0.0
        %1036 = vmatprep.subr.mxu0 0.0
        %1037 = vmatpush1.msra.mxu0 0.0
        %1038 = vmatprep.subr.mxu0 0.0
        %1039 = vmatpush1.msra.mxu0 0.0
        %1040 = vmatprep.subr.mxu0 0.0
        %1041 = vmatpush1.msra.mxu0 0.0
        %1042 = vmatprep.subr.mxu0 0.0
        %1043 = vmatpush1.msra.mxu0 0.0
        %1044 = vmatprep.subr.mxu0 0.0
        %1045 = vmatpush1.msra.mxu0 0.0
        %1046 = vmatprep.subr.mxu0 0.0
        %1047 = vmatpush1.msra.mxu0 %v1014
        %1048 = vmatprep.subr.mxu0 0.0
        %1049 = vmatpush2.msra.mxu0 0.0
        %1050 = vmatprep.subr.mxu0 0.0
        %1051 = vmatpush2.msra.mxu0 0.0
        %1052 = vmatprep.subr.mxu0 0.0
        %1053 = vmatpush2.msra.mxu0 0.0
        %1054 = vmatprep.subr.mxu0 0.0
        %1055 = vmatpush2.msra.mxu0 0.0
        %1056 = vmatprep.subr.mxu0 0.0
        %1057 = vmatpush2.msra.mxu0 0.0
        %1058 = vmatprep.subr.mxu0 0.0
        %1059 = vmatpush2.msra.mxu0 0.0
        %1060 = vmatprep.subr.mxu0 0.0
        %1061 = vmatpush2.msra.mxu0 0.0
        %1062 = vmatprep.subr.mxu0 0.0
        %1063 = vmatpush2.msra.mxu0 0.0
        %1064 = vmatprep.subr.mxu0 0.0
        %1065 = vmatpush2.msra.mxu0 0.0
        %1066 = vmatprep.subr.mxu0 0.0
        %1067 = vmatpush2.msra.mxu0 0.0
        %1068 = vmatprep.subr.mxu0 0.0
        %1069 = vmatpush2.msra.mxu0 0.0
        %1070 = vmatprep.subr.mxu0 0.0
        %1071 = vmatpush2.msra.mxu0 0.0
        %1072 = vmatprep.subr.mxu0 0.0
        %1073 = vmatpush2.msra.mxu0 0.0
        %1074 = vmatprep.subr.mxu0 0.0
        %1075 = vmatpush2.msra.mxu0 0.0
        %1076 = vmatprep.subr.mxu0 0.0
        %1077 = vmatpush2.msra.mxu0 0.0
        %1078 = vmatprep.subr.mxu0 0.0
        %1079 = vmatpush2.msra.mxu0 0.0
        %1080 = vmatprep.mubr.f32.mxu0 0.0
        %1081 = vmatmul.mubr.f32.gmra.mxu0 %v704
        %v1082 = vpop.f32.mrf.mxu0
        %v1083 = vadd.f32 %v1011, %v1082
        %v1084 = vpop.f32.mrf.mxu0
        %1085 = vdwg.mxu0
        %v1086 = vmax.f32 %v1083, 0.0
        %v1087 = vld [vmem:[#allocation8] sm:$0xf]
        %v1088 = vld [vmem:[#allocation8 + $0x4] sm:$0xf]
        %v1089 = vld [vmem:[#allocation8 + $0x8] sm:$0xf]
        %v1090 = vld [vmem:[#allocation8 + $0xc] sm:$0xf]
        %v1091 = vld [vmem:[#allocation8 + $0x10] sm:$0xf]
        %v1092 = vld [vmem:[#allocation8 + $0x14] sm:$0xf]
        %v1093 = vld [vmem:[#allocation8 + $0x18] sm:$0xf]
        %v1094 = vld [vmem:[#allocation8 + $0x1c] sm:$0xf]
        %v1095 = vld [vmem:[#allocation8 + $0x20] sm:$0xf]
        %v1096 = vld [vmem:[#allocation8 + $0x24] sm:$0xf]
        %v1097 = vld [vmem:[#allocation8 + $0x28] sm:$0xf]
        %v1098 = vld [vmem:[#allocation8 + $0x2c] sm:$0xf]
        %v1099 = vld [vmem:[#allocation8 + $0x30] sm:$0xf]
        %v1100 = vld [vmem:[#allocation8 + $0x34] sm:$0xf]
        %v1101 = vld [vmem:[#allocation8 + $0x38] sm:$0xf]
        %v1102 = vld [vmem:[#allocation8 + $0x3c] sm:$0xf]
        %v1103 = vld [vmem:[%s11] sm:$0x1]
        %v1104 = vpack.c.bf16 %v1086, %v1086
        %v1106 = vlaneseq
        %v1107 = vshrl.u32 %v1106, 7
        %v1108 = vsub.s32 0, %v1107
        %v1109 = vrot.slane %v1103, %v1108
        %v1127 = vunpack.c.l.b16 %v1087
        %v1128 = vunpack.c.l.b16 %v1088
        %v1129 = vunpack.c.l.b16 %v1089
        %v1130 = vunpack.c.l.b16 %v1090
        %v1131 = vunpack.c.l.b16 %v1091
        %v1132 = vunpack.c.l.b16 %v1092
        %v1133 = vunpack.c.l.b16 %v1093
        %v1134 = vunpack.c.l.b16 %v1094
        %v1135 = vunpack.c.l.b16 %v1095
        %v1136 = vunpack.c.l.b16 %v1096
        %v1137 = vunpack.c.l.b16 %v1097
        %v1138 = vunpack.c.l.b16 %v1098
        %v1139 = vunpack.c.l.b16 %v1099
        %v1140 = vunpack.c.l.b16 %v1100
        %v1141 = vunpack.c.l.b16 %v1101
        %v1142 = vunpack.c.l.b16 %v1102
        %v1143 = vpack.c.b16 %v1128, %v1127
        %v1144 = vpack.c.b16 %v1130, %v1129
        %v1145 = vpack.c.b16 %v1132, %v1131
        %v1146 = vpack.c.b16 %v1134, %v1133
        %v1147 = vpack.c.b16 %v1136, %v1135
        %v1148 = vpack.c.b16 %v1138, %v1137
        %v1149 = vpack.c.b16 %v1140, %v1139
        %v1150 = vpack.c.b16 %v1142, %v1141
        %1159 = vmatprep.subr.bf16.mxu0 0
        %1160 = vmatpush1.bf16.msra.mxu0 %v1150
        %1161 = vmatprep.subr.bf16.mxu0 0
        %1162 = vmatpush1.bf16.msra.mxu0 %v1149
        %1163 = vmatprep.subr.bf16.mxu0 0
        %1164 = vmatpush1.bf16.msra.mxu0 %v1148
        %1165 = vmatprep.subr.bf16.mxu0 0
        %1166 = vmatpush1.bf16.msra.mxu0 %v1147
        %1167 = vmatprep.subr.bf16.mxu0 0
        %1168 = vmatpush1.bf16.msra.mxu0 %v1146
        %1169 = vmatprep.subr.bf16.mxu0 0
        %1170 = vmatpush1.bf16.msra.mxu0 %v1145
        %1171 = vmatprep.subr.bf16.mxu0 0
        %1172 = vmatpush1.bf16.msra.mxu0 %v1144
        %1173 = vmatprep.subr.bf16.mxu0 0
        %1174 = vmatpush1.bf16.msra.mxu0 %v1143
        %1175 = vmatprep.subr.bf16.mxu0 0
        %1176 = vmatpush2.bf16.msra.mxu0 0
        %1177 = vmatprep.subr.bf16.mxu0 0
        %1178 = vmatpush2.bf16.msra.mxu0 0
        %1179 = vmatprep.subr.bf16.mxu0 0
        %1180 = vmatpush2.bf16.msra.mxu0 0
        %1181 = vmatprep.subr.bf16.mxu0 0
        %1182 = vmatpush2.bf16.msra.mxu0 0
        %1183 = vmatprep.subr.bf16.mxu0 0
        %1184 = vmatpush2.bf16.msra.mxu0 0
        %1185 = vmatprep.subr.bf16.mxu0 0
        %1186 = vmatpush2.bf16.msra.mxu0 0
        %1187 = vmatprep.subr.bf16.mxu0 0
        %1188 = vmatpush2.bf16.msra.mxu0 0
        %1189 = vmatprep.subr.bf16.mxu0 0
        %1190 = vmatpush2.bf16.msra.mxu0 0
        %1191 = vmatprep.mubr.bf16.mxu0 0
        %1192 = vmatmul.mubr.bf16.gmra.mxu0 %v1104
        %v1193 = vpop.f32.mrf.mxu0
        %v1194 = vadd.f32 %v1109, %v1193
        %v1195 = vpop.f32.mrf.mxu0
        %v1196 = vpop.f32.mrf.mxu0
        %v1197 = vpop.f32.mrf.mxu0
        %1198 = vdwg.mxu0
        %v1199 = vld [vmem:[%s12] sm:$0x7]
        %v1200 = vld [vmem:[%s13] sm:$0x1]
        %v1202 = vlaneseq
        %v1203 = vshrl.u32 %v1202, 7
        %v1204 = vsub.s32 0, %v1203
        %v1205 = vrot.slane %v1200, %v1204
        %v1208 = vsel %vm702, %v621, 0
        %v1211 = vsel %vm706, %v1199, 0
        %1213 = vmatprep.subr.mxu0 0.0
        %1214 = vmatpush1.msra.mxu0 0.0
        %1215 = vmatprep.subr.mxu0 0.0
        %1216 = vmatpush1.msra.mxu0 0.0
        %1217 = vmatprep.subr.mxu0 0.0
        %1218 = vmatpush1.msra.mxu0 0.0
        %1219 = vmatprep.subr.mxu0 0.0
        %1220 = vmatpush1.msra.mxu0 0.0
        %1221 = vmatprep.subr.mxu0 0.0
        %1222 = vmatpush1.msra.mxu0 0.0
        %1223 = vmatprep.subr.mxu0 0.0
        %1224 = vmatpush1.msra.mxu0 0.0
        %1225 = vmatprep.subr.mxu0 0.0
        %1226 = vmatpush1.msra.mxu0 0.0
        %1227 = vmatprep.subr.mxu0 0.0
        %1228 = vmatpush1.msra.mxu0 0.0
        %1229 = vmatprep.subr.mxu0 0.0
        %1230 = vmatpush1.msra.mxu0 0.0
        %1231 = vmatprep.subr.mxu0 0.0
        %1232 = vmatpush1.msra.mxu0 0.0
        %1233 = vmatprep.subr.mxu0 0.0
        %1234 = vmatpush1.msra.mxu0 0.0
        %1235 = vmatprep.subr.mxu0 0.0
        %1236 = vmatpush1.msra.mxu0 0.0
        %1237 = vmatprep.subr.mxu0 0.0
        %1238 = vmatpush1.msra.mxu0 0.0
        %1239 = vmatprep.subr.mxu0 0.0
        %1240 = vmatpush1.msra.mxu0 0.0
        %1241 = vmatprep.subr.mxu0 0.0
        %1242 = vmatpush1.msra.mxu0 0.0
        %1243 = vmatprep.subr.mxu0 0.0
        %1244 = vmatpush1.msra.mxu0 %v1211
        %1245 = vmatprep.subr.mxu0 0.0
        %1246 = vmatpush2.msra.mxu0 0.0
        %1247 = vmatprep.subr.mxu0 0.0
        %1248 = vmatpush2.msra.mxu0 0.0
        %1249 = vmatprep.subr.mxu0 0.0
        %1250 = vmatpush2.msra.mxu0 0.0
        %1251 = vmatprep.subr.mxu0 0.0
        %1252 = vmatpush2.msra.mxu0 0.0
        %1253 = vmatprep.subr.mxu0 0.0
        %1254 = vmatpush2.msra.mxu0 0.0
        %1255 = vmatprep.subr.mxu0 0.0
        %1256 = vmatpush2.msra.mxu0 0.0
        %1257 = vmatprep.subr.mxu0 0.0
        %1258 = vmatpush2.msra.mxu0 0.0
        %1259 = vmatprep.subr.mxu0 0.0
        %1260 = vmatpush2.msra.mxu0 0.0
        %1261 = vmatprep.subr.mxu0 0.0
        %1262 = vmatpush2.msra.mxu0 0.0
        %1263 = vmatprep.subr.mxu0 0.0
        %1264 = vmatpush2.msra.mxu0 0.0
        %1265 = vmatprep.subr.mxu0 0.0
        %1266 = vmatpush2.msra.mxu0 0.0
        %1267 = vmatprep.subr.mxu0 0.0
        %1268 = vmatpush2.msra.mxu0 0.0
        %1269 = vmatprep.subr.mxu0 0.0
        %1270 = vmatpush2.msra.mxu0 0.0
        %1271 = vmatprep.subr.mxu0 0.0
        %1272 = vmatpush2.msra.mxu0 0.0
        %1273 = vmatprep.subr.mxu0 0.0
        %1274 = vmatpush2.msra.mxu0 0.0
        %1275 = vmatprep.subr.mxu0 0.0
        %1276 = vmatpush2.msra.mxu0 0.0
        %1277 = vmatprep.mubr.f32.mxu0 0.0
        %1278 = vmatmul.mubr.f32.gmra.mxu0 %v1208
        %v1279 = vpop.f32.mrf.mxu0
        %v1280 = vadd.f32 %v1205, %v1279
        %v1281 = vpop.f32.mrf.mxu0
        %1282 = vdwg.mxu0
        %v1283 = vmax.f32 %v1280, 0.0
        %v1284 = vld [vmem:[#allocation10] sm:$0xf]
        %v1285 = vld [vmem:[#allocation10 + $0x4] sm:$0xf]
        %v1286 = vld [vmem:[#allocation10 + $0x8] sm:$0xf]
        %v1287 = vld [vmem:[#allocation10 + $0xc] sm:$0xf]
        %v1288 = vld [vmem:[#allocation10 + $0x10] sm:$0xf]
        %v1289 = vld [vmem:[#allocation10 + $0x14] sm:$0xf]
        %v1290 = vld [vmem:[#allocation10 + $0x18] sm:$0xf]
        %v1291 = vld [vmem:[#allocation10 + $0x1c] sm:$0xf]
        %v1292 = vld [vmem:[#allocation10 + $0x20] sm:$0xf]
        %v1293 = vld [vmem:[#allocation10 + $0x24] sm:$0xf]
        %v1294 = vld [vmem:[#allocation10 + $0x28] sm:$0xf]
        %v1295 = vld [vmem:[#allocation10 + $0x2c] sm:$0xf]
        %v1296 = vld [vmem:[#allocation10 + $0x30] sm:$0xf]
        %v1297 = vld [vmem:[#allocation10 + $0x34] sm:$0xf]
        %v1298 = vld [vmem:[#allocation10 + $0x38] sm:$0xf]
        %v1299 = vld [vmem:[#allocation10 + $0x3c] sm:$0xf]
        %v1300 = vld [vmem:[%s15] sm:$0x1]
        %v1301 = vpack.c.bf16 %v1283, %v1283
        %v1303 = vlaneseq
        %v1304 = vshrl.u32 %v1303, 7
        %v1305 = vsub.s32 0, %v1304
        %v1306 = vrot.slane %v1300, %v1305
        %v1324 = vunpack.c.l.b16 %v1284
        %v1325 = vunpack.c.l.b16 %v1285
        %v1326 = vunpack.c.l.b16 %v1286
        %v1327 = vunpack.c.l.b16 %v1287
        %v1328 = vunpack.c.l.b16 %v1288
        %v1329 = vunpack.c.l.b16 %v1289
        %v1330 = vunpack.c.l.b16 %v1290
        %v1331 = vunpack.c.l.b16 %v1291
        %v1332 = vunpack.c.l.b16 %v1292
        %v1333 = vunpack.c.l.b16 %v1293
        %v1334 = vunpack.c.l.b16 %v1294
        %v1335 = vunpack.c.l.b16 %v1295
        %v1336 = vunpack.c.l.b16 %v1296
        %v1337 = vunpack.c.l.b16 %v1297
        %v1338 = vunpack.c.l.b16 %v1298
        %v1339 = vunpack.c.l.b16 %v1299
        %v1340 = vpack.c.b16 %v1325, %v1324
        %v1341 = vpack.c.b16 %v1327, %v1326
        %v1342 = vpack.c.b16 %v1329, %v1328
        %v1343 = vpack.c.b16 %v1331, %v1330
        %v1344 = vpack.c.b16 %v1333, %v1332
        %v1345 = vpack.c.b16 %v1335, %v1334
        %v1346 = vpack.c.b16 %v1337, %v1336
        %v1347 = vpack.c.b16 %v1339, %v1338
        %1356 = vmatprep.subr.bf16.mxu0 0
        %1357 = vmatpush1.bf16.msra.mxu0 %v1347
        %1358 = vmatprep.subr.bf16.mxu0 0
        %1359 = vmatpush1.bf16.msra.mxu0 %v1346
        %1360 = vmatprep.subr.bf16.mxu0 0
        %1361 = vmatpush1.bf16.msra.mxu0 %v1345
        %1362 = vmatprep.subr.bf16.mxu0 0
        %1363 = vmatpush1.bf16.msra.mxu0 %v1344
        %1364 = vmatprep.subr.bf16.mxu0 0
        %1365 = vmatpush1.bf16.msra.mxu0 %v1343
        %1366 = vmatprep.subr.bf16.mxu0 0
        %1367 = vmatpush1.bf16.msra.mxu0 %v1342
        %1368 = vmatprep.subr.bf16.mxu0 0
        %1369 = vmatpush1.bf16.msra.mxu0 %v1341
        %1370 = vmatprep.subr.bf16.mxu0 0
        %1371 = vmatpush1.bf16.msra.mxu0 %v1340
        %1372 = vmatprep.subr.bf16.mxu0 0
        %1373 = vmatpush2.bf16.msra.mxu0 0
        %1374 = vmatprep.subr.bf16.mxu0 0
        %1375 = vmatpush2.bf16.msra.mxu0 0
        %1376 = vmatprep.subr.bf16.mxu0 0
        %1377 = vmatpush2.bf16.msra.mxu0 0
        %1378 = vmatprep.subr.bf16.mxu0 0
        %1379 = vmatpush2.bf16.msra.mxu0 0
        %1380 = vmatprep.subr.bf16.mxu0 0
        %1381 = vmatpush2.bf16.msra.mxu0 0
        %1382 = vmatprep.subr.bf16.mxu0 0
        %1383 = vmatpush2.bf16.msra.mxu0 0
        %1384 = vmatprep.subr.bf16.mxu0 0
        %1385 = vmatpush2.bf16.msra.mxu0 0
        %1386 = vmatprep.subr.bf16.mxu0 0
        %1387 = vmatpush2.bf16.msra.mxu0 0
        %1388 = vmatprep.mubr.bf16.mxu0 0
        %1389 = vmatmul.mubr.bf16.gmra.mxu0 %v1301
        %v1390 = vpop.f32.mrf.mxu0
        %v1391 = vadd.f32 %v1306, %v1390
        %v1392 = vpop.f32.mrf.mxu0
        %v1393 = vpop.f32.mrf.mxu0
        %v1394 = vpop.f32.mrf.mxu0
        %1395 = vdwg.mxu0
        %v1396 = vpack.c.bf16 %v1391, %v1391
        %v1397 = vpack.c.bf16 %v1194, %v1194
        %1398 = vmatprep.subr.bf16.mxu0 0
        %1399 = vmatpush1.bf16.xpose.msra.mxu0 0
        %1400 = vmatprep.subr.bf16.mxu0 0
        %1401 = vmatpush1.bf16.xpose.msra.mxu0 0
        %1402 = vmatprep.subr.bf16.mxu0 0
        %1403 = vmatpush1.bf16.xpose.msra.mxu0 0
        %1404 = vmatprep.subr.bf16.mxu0 0
        %1405 = vmatpush1.bf16.xpose.msra.mxu0 0
        %1406 = vmatprep.subr.bf16.mxu0 0
        %1407 = vmatpush1.bf16.xpose.msra.mxu0 0
        %1408 = vmatprep.subr.bf16.mxu0 0
        %1409 = vmatpush1.bf16.xpose.msra.mxu0 0
        %1410 = vmatprep.subr.bf16.mxu0 0
        %1411 = vmatpush1.bf16.xpose.msra.mxu0 0
        %1412 = vmatprep.subr.bf16.mxu0 0
        %1413 = vmatpush1.bf16.xpose.msra.mxu0 %v1397
        %1414 = vmatprep.subr.bf16.mxu0 0
        %1415 = vmatpush2.bf16.xpose.msra.mxu0 0
        %1416 = vmatprep.subr.bf16.mxu0 0
        %1417 = vmatpush2.bf16.xpose.msra.mxu0 0
        %1418 = vmatprep.subr.bf16.mxu0 0
        %1419 = vmatpush2.bf16.xpose.msra.mxu0 0
        %1420 = vmatprep.subr.bf16.mxu0 0
        %1421 = vmatpush2.bf16.xpose.msra.mxu0 0
        %1422 = vmatprep.subr.bf16.mxu0 0
        %1423 = vmatpush2.bf16.xpose.msra.mxu0 0
        %1424 = vmatprep.subr.bf16.mxu0 0
        %1425 = vmatpush2.bf16.xpose.msra.mxu0 0
        %1426 = vmatprep.subr.bf16.mxu0 0
        %1427 = vmatpush2.bf16.xpose.msra.mxu0 0
        %1428 = vmatprep.subr.bf16.mxu0 0
        %1429 = vmatpush2.bf16.xpose.msra.mxu0 0
        %1430 = vmatprep.mubr.bf16.mxu0 0
        %1431 = vmatmul.mubr.bf16.gmra.mxu0 %v1396
        %v1432 = vpop.f32.mrf.mxu0
        %v1433 = vadd.f32 0.0, %v1432
        %v1434 = vpop.f32.mrf.mxu0
        %v1435 = vpop.f32.mrf.mxu0
        %v1436 = vpop.f32.mrf.mxu0
        %1437 = vdwg.mxu0
        %v1438 = vsel %vm944, %v1433, -inf
        %1439 = vmax.xlane.f32.xlu0 %v1438
        %v1440 = vpop.xlane.xlu0 %1439
        %v1441 = vsub.f32 %v1433, %v1440
        %v1442 = vmul.f32 %v1441, 1.442695
        %v1443 = vpow.pop %v1442
        %v1444 = vsel %vm944, %v1443, 0.0
        %1445 = vadd.xlane.f32.xlu0 %v1444
        %v1446 = vpop.xlane.xlu0 %1445
        %v1447 = vrcp.pop %v1446
        %v1448 = vmul.f32 1.0, %v1447
        %v1449 = vmul.f32 %v1443, %v1448
        %v1450 = vpack.c.bf16 %v1449, %v1449
        %v1451 = vpack.c.bf16 %v1000, %v1000
        %v1453 = vsel %vm944, %v1450, 0
        %v1456 = vsel %vm961, %v1451, 0
        %1458 = vmatprep.subr.bf16.mxu0 0
        %1459 = vmatpush1.bf16.msra.mxu0 0
        %1460 = vmatprep.subr.bf16.mxu0 0
        %1461 = vmatpush1.bf16.msra.mxu0 0
        %1462 = vmatprep.subr.bf16.mxu0 0
        %1463 = vmatpush1.bf16.msra.mxu0 0
        %1464 = vmatprep.subr.bf16.mxu0 0
        %1465 = vmatpush1.bf16.msra.mxu0 0
        %1466 = vmatprep.subr.bf16.mxu0 0
        %1467 = vmatpush1.bf16.msra.mxu0 0
        %1468 = vmatprep.subr.bf16.mxu0 0
        %1469 = vmatpush1.bf16.msra.mxu0 0
        %1470 = vmatprep.subr.bf16.mxu0 0
        %1471 = vmatpush1.bf16.msra.mxu0 0
        %1472 = vmatprep.subr.bf16.mxu0 0
        %1473 = vmatpush1.bf16.msra.mxu0 %v1456
        %1474 = vmatprep.subr.bf16.mxu0 0
        %1475 = vmatpush2.bf16.msra.mxu0 0
        %1476 = vmatprep.subr.bf16.mxu0 0
        %1477 = vmatpush2.bf16.msra.mxu0 0
        %1478 = vmatprep.subr.bf16.mxu0 0
        %1479 = vmatpush2.bf16.msra.mxu0 0
        %1480 = vmatprep.subr.bf16.mxu0 0
        %1481 = vmatpush2.bf16.msra.mxu0 0
        %1482 = vmatprep.subr.bf16.mxu0 0
        %1483 = vmatpush2.bf16.msra.mxu0 0
        %1484 = vmatprep.subr.bf16.mxu0 0
        %1485 = vmatpush2.bf16.msra.mxu0 0
        %1486 = vmatprep.subr.bf16.mxu0 0
        %1487 = vmatpush2.bf16.msra.mxu0 0
        %1488 = vmatprep.subr.bf16.mxu0 0
        %1489 = vmatpush2.bf16.msra.mxu0 0
        %1490 = vmatprep.mubr.bf16.mxu0 0
        %1491 = vmatmul.mubr.bf16.gmra.mxu0 %v1453
        %v1492 = vpop.f32.mrf.mxu0
        %v1493 = vadd.f32 0.0, %v1492
        %v1494 = vpop.f32.mrf.mxu0
        %v1495 = vpop.f32.mrf.mxu0
        %v1496 = vpop.f32.mrf.mxu0
        %1497 = vdwg.mxu0
        %1498 = vst [vmem:[%s605] sm:$0xff] %v1493
        %s1499 = sand.u32 %s392, 1
        %s1500 = scalar_lea.sflag [#allocation4], %s1499
        %s1501 = sand.u32 %s392, 1
        %s1502 = smul.addr %s1501, 8
        %s1503 = scalar_lea.vmem [#allocation11], %s1502
        // Predicated region
        $region105: #{tpu_custom_call.1} parent=83 // pred_check
          %p1504 = pneg %p402
        $region106: #{tpu_custom_call.1} parent=83 // pred_check_branch
          %1506 = sbr.rel (%p1504) target = $region108
        $region107: #{tpu_custom_call.1} parent=83 // pred_region
          %s1508 = ssub.s32 128, 128
          %1509 = vsyncadd %s1500, %s1508
          %s1510 = smul.addr %s33, 128
          %s1511 = scalar_lea.hbm %s16, %s1510
          %s1513 = sshll.u32 %s1503, 4
          %s1514 = int_to_ptr.vmem [resolvable:$true] %s1513
          %1516 = dma.vmem_to_hbm [thread:$0]  %s1514, 128, %s1511, %s1500
        $region108: #{tpu_custom_call.1} parent=83 // pred_fallthru
          _
      $region84: #{tpu_custom_call.1} parent=5 // pred_fallthru
        _
      %p1517 = scmp.le.s32.totalorder 2, %s28
      // Predicated region
      $region109: #{tpu_custom_call.1} parent=5 // pred_check
        %p1518 = pneg %p1517
      $region110: #{tpu_custom_call.1} parent=5 // pred_check_branch
        %1520 = sbr.rel (%p1518) target = $region112
      $region111: #{tpu_custom_call.1} parent=5 // pred_region
        %s1521 = ssub.s32 %s28, 2
        // Predicated region
        $region113: #{tpu_custom_call.1} parent=111 // pred_check
          %p1522 = pneg %p408
        $region114: #{tpu_custom_call.1} parent=111 // pred_check_branch
          %1524 = sbr.rel (%p1522) target = $region116
        $region115: #{tpu_custom_call.1} parent=111 // pred_region
          %s1525 = sand.u32 %s393, 1
          %s1526 = scalar_lea.sflag [#allocation4], %s1525
          %s1527 = sand.u32 %s393, 1
          %s1528 = smul.addr %s1527, 8
          %s1529 = scalar_lea.vmem [#allocation11], %s1528
          %1530 = dma.done %s1526, 128
        $region116: #{tpu_custom_call.1} parent=111 // pred_fallthru
          _
      $region112: #{tpu_custom_call.1} parent=5 // pred_fallthru
        _
    $region6: #{tpu_custom_call.1} parent=1 // loop_footer
      %s32 = sadd.s32 1, %s28
    $region7: #{tpu_custom_call.1} parent=1 // loop_footer_branch
      %27 = sbr.rel target = $region3
    $region8: #{tpu_custom_call.1} parent=1 // loop_exit
      _
    %1531 = vsyncpa [#allocation3], 1
    %s1532 = scalar_lea.sflag [#allocation3], 1
    %1533 = vsyncpa %s1532, 1
    %1534 = vsyncpa [#allocation6], 1
    %1535 = vsyncpa [#allocation9], 1
    %1536 = vsyncpa [#allocation4], 1
    %s1537 = scalar_lea.sflag [#allocation4], 1
    %1538 = vsyncpa %s1537, 1

</llo_original>
